<compile_context>
chip_gen: v7x
topology: tpu7x:2x2x1
jax: 0.10.0
libtpu: 0.0.40
codegen_flags: <defaults>
</compile_context>

<pallas_src>
import jax
import jax.numpy as jnp
from jax.experimental import pallas as pl
from jax.experimental.pallas import tpu as pltpu

D_HID = 512


def _round_up(x, m):
    return ((x + m - 1) // m) * m


def example_code_kernel(x_ref, p1_ref, p2_ref, wt_ref, b_ref, o_ref):
    f32 = jnp.float32
    bf16 = jnp.bfloat16

    x = x_ref[...]          # (TM, D) bf16
    p1 = p1_ref[...]        # (D, D)  bf16
    p2 = p2_ref[...]        # (D, D)  bf16
    wt = wt_ref[...]        # (D, D)  bf16, already transposed: (in, out)
    # Hoist the bias broadcast once; reused for both bias-add sites.
    bias = jnp.broadcast_to(b_ref[...], o_ref.shape)   # (TM, D) f32

    # --- stage 0 ---
    h = jnp.dot(x, p1, preferred_element_type=f32)
    h = jnp.maximum(h, 0.0)
    # --- stage 1 ---
    h = jnp.dot(h.astype(bf16), p1, preferred_element_type=f32)
    h = jnp.dot(h.astype(bf16), wt, preferred_element_type=f32) + bias
    # --- stage 2 ---
    h = jnp.maximum(h, 0.0)
    h = jnp.dot(h.astype(bf16), p2, preferred_element_type=f32)
    # --- stage 3 ---
    h = jnp.dot(h.astype(bf16), wt, preferred_element_type=f32) + bias
    o_ref[...] = jnp.maximum(h, 0.0).astype(o_ref.dtype)


def example_code_forward(x, mm_param, mm_param2, lin_w, lin_b, *, block_m=None):
    B, D = x.shape
    assert D == D_HID

    # bf16 for DMA + MXU inputs (f32 accumulation happens in-kernel).
    x_bf = x.astype(jnp.bfloat16)
    p1 = mm_param.astype(jnp.bfloat16)
    p2 = mm_param2.astype(jnp.bfloat16)
    wt = lin_w.T.astype(jnp.bfloat16)          # pre-transposed: (in, out)
    b2d = lin_b.reshape(1, D).astype(jnp.float32)

    if block_m is None:
        # Full-row tile for small B; 256-row tiles when batch is large
        # (amortizes per-step overhead, still fits VMEM comfortably).
        block_m = min(256, _round_up(B, 8))
    Bp = _round_up(B, block_m)
    if Bp != B:
        x_bf = jnp.pad(x_bf, ((0, Bp - B), (0, 0)))
    grid = (Bp // block_m,)

    flops = 5 * 2 * Bp * D * D
    bytes_accessed = 3 * D * D * 2 + D * 4 + Bp * D * 2 + Bp * D * 4
    cost = pl.CostEstimate(flops=flops, transcendentals=0,
                           bytes_accessed=bytes_accessed)

    out = pl.pallas_call(
        example_code_kernel,
        out_shape=jax.ShapeDtypeStruct((Bp, D), jnp.float32),
        grid_spec=pltpu.PrefetchScalarGridSpec(
            num_scalar_prefetch=0,
            grid=grid,
            in_specs=[
                pl.BlockSpec((block_m, D), lambda i: (i, 0)),  # x (tiled over batch)
                pl.BlockSpec((D, D), lambda i: (0, 0)),        # mm_param (resident)
                pl.BlockSpec((D, D), lambda i: (0, 0)),        # mm_param2 (resident)
                pl.BlockSpec((D, D), lambda i: (0, 0)),        # lin weight^T (resident)
                pl.BlockSpec((1, D), lambda i: (0, 0)),        # lin bias (resident)
            ],
            out_specs=pl.BlockSpec((block_m, D), lambda i: (i, 0)),
        ),
        compiler_params=pltpu.CompilerParams(
            dimension_semantics=("parallel",),
            vmem_limit_bytes=16 * 1024 * 1024,
        ),
        cost_estimate=cost,
    )(x_bf, p1, p2, wt, b2d)
    return out[:B]


def reference_forward_f32(x, p1, p2, w, b):
    """Exact f32 semantics of the original PyTorch module."""
    h = jnp.maximum(x @ p1, 0.0)
    h = h @ p1
    h = h @ w.T + b
    h = jnp.maximum(h, 0.0)
    h = h @ p2
    h = h @ w.T + b
    return jnp.maximum(h, 0.0)


def reference_forward_bf16(x, p1, p2, w, b):
    """Same math as the kernel (bf16 inputs, f32 accumulation)."""
    bf16, f32 = jnp.bfloat16, jnp.float32
    xb, p1b, p2b = x.astype(bf16), p1.astype(bf16), p2.astype(bf16)
    wtb, bb = w.T.astype(bf16), b.astype(f32)
    dot = lambda a, c: jnp.dot(a, c, preferred_element_type=f32)
    h = jnp.maximum(dot(xb, p1b), 0.0)
    h = dot(h.astype(bf16), p1b)
    h = dot(h.astype(bf16), wtb) + bb
    h = jnp.maximum(h, 0.0)
    h = dot(h.astype(bf16), p2b)
    h = dot(h.astype(bf16), wtb) + bb
    return jnp.maximum(h, 0.0)


if __name__ == "__main__":
    # TODO(synk): pipe_split() is a pipeline-parallelism marker (no math); the
    # whole chain is fused into one kernel on a single device.
    key = jax.random.PRNGKey(0)
    k_x, k_p1, k_p2, k_w, k_b = jax.random.split(key, 5)

    B = 8  # small batch
    x = jax.random.normal(k_x, (B, D_HID), dtype=jnp.float32)
    mm_param = jax.random.normal(k_p1, (D_HID, D_HID), dtype=jnp.float32) * 0.05
    mm_param2 = jax.random.normal(k_p2, (D_HID, D_HID), dtype=jnp.float32) * 0.05
    lin_w = jax.random.normal(k_w, (D_HID, D_HID), dtype=jnp.float32) * 0.05
    lin_b = jax.random.normal(k_b, (D_HID,), dtype=jnp.float32) * 0.05

    out = example_code_forward(x, mm_param, mm_param2, lin_w, lin_b)
    out = jax.block_until_ready(out)
    assert out.shape == (B, D_HID)

    # 1) Kernel logic check: match a reference using identical bf16 numerics.
    ref_bf16 = reference_forward_bf16(x, mm_param, mm_param2, lin_w, lin_b)
    assert jnp.allclose(out, ref_bf16, rtol=1e-4, atol=1e-3), \
        "mismatch vs bf16-matched reference"

    # 2) Module semantics check: bf16 quantization drift vs pure-f32 reference
    #    stays within a loose tolerance.
    ref_f32 = reference_forward_f32(x, mm_param, mm_param2, lin_w, lin_b)
    assert jnp.allclose(out, ref_f32, rtol=5e-2, atol=5e-2), \
        "bf16 drift vs f32 reference exceeded tolerance"

    print("KERNEL_OK")
</pallas_src>

<mosaic_0001>
module attributes {stable_mosaic.version = 11 : i64} {
  func.func @example_code_kernel(%arg0: i32, %arg1: memref<8x512xbf16, #tpu.memory_space<vmem>>, %arg2: memref<512x512xbf16, #tpu.memory_space<vmem>>, %arg3: memref<512x512xbf16, #tpu.memory_space<vmem>>, %arg4: memref<512x512xbf16, #tpu.memory_space<vmem>>, %arg5: memref<1x512xf32, #tpu.memory_space<vmem>>, %arg6: memref<8x512xf32, #tpu.memory_space<vmem>>) attributes {dimension_semantics = [#tpu.dimension_semantics<parallel>], iteration_bounds = array<i64: 1>, scalar_prefetch = 0 : i64, scratch_operands = 0 : i64, tpu.core_type = #tpu.core_type<tc>, window_params = [{transform_indices = @transform_0, window_bounds = array<i64: 8, 512>}, {pipeline_mode = #tpu.pipeline_mode<synchronous>, transform_indices = @transform_1, window_bounds = array<i64: 512, 512>}, {pipeline_mode = #tpu.pipeline_mode<synchronous>, transform_indices = @transform_2, window_bounds = array<i64: 512, 512>}, {pipeline_mode = #tpu.pipeline_mode<synchronous>, transform_indices = @transform_3, window_bounds = array<i64: 512, 512>}, {pipeline_mode = #tpu.pipeline_mode<synchronous>, transform_indices = @transform_4, window_bounds = array<i64: 1, 512>}, {transform_indices = @transform_5, window_bounds = array<i64: 8, 512>}]} {
    %c0 = arith.constant 0 : index
    %c0_0 = arith.constant 0 : index
    %0 = vector.load %arg1[%c0, %c0_0] : memref<8x512xbf16, #tpu.memory_space<vmem>>, vector<8x512xbf16>
    %c0_1 = arith.constant 0 : index
    %c0_2 = arith.constant 0 : index
    %1 = vector.load %arg2[%c0_1, %c0_2] : memref<512x512xbf16, #tpu.memory_space<vmem>>, vector<512x512xbf16>
    %c0_3 = arith.constant 0 : index
    %c0_4 = arith.constant 0 : index
    %2 = vector.load %arg3[%c0_3, %c0_4] : memref<512x512xbf16, #tpu.memory_space<vmem>>, vector<512x512xbf16>
    %c0_5 = arith.constant 0 : index
    %c0_6 = arith.constant 0 : index
    %3 = vector.load %arg4[%c0_5, %c0_6] : memref<512x512xbf16, #tpu.memory_space<vmem>>, vector<512x512xbf16>
    %c0_7 = arith.constant 0 : index
    %c0_8 = arith.constant 0 : index
    %4 = vector.load %arg5[%c0_7, %c0_8] : memref<1x512xf32, #tpu.memory_space<vmem>>, vector<1x512xf32>
    %5 = vector.shape_cast %4 : vector<1x512xf32> to vector<1x512xf32>
    %6 = vector.broadcast %5 : vector<1x512xf32> to vector<8x512xf32>
    %cst = arith.constant dense<0.000000e+00> : vector<8x512xf32>
    %7 = tpu.matmul %0, %1, %cst {dimension_numbers = #tpu.dot_dimension_numbers<[1], [0], [0], [1], [0, 0, 1, 1], [], []>} : vector<8x512xbf16>, vector<512x512xbf16>, vector<8x512xf32> -> vector<8x512xf32>
    %cst_9 = arith.constant 0.000000e+00 : f32
    %8 = vector.broadcast %cst_9 : f32 to vector<8x512xf32>
    %9 = arith.maximumf %7, %8 : vector<8x512xf32>
    %10 = arith.truncf %9 : vector<8x512xf32> to vector<8x512xbf16>
    %cst_10 = arith.constant dense<0.000000e+00> : vector<8x512xf32>
    %11 = tpu.matmul %10, %1, %cst_10 {dimension_numbers = #tpu.dot_dimension_numbers<[1], [0], [0], [1], [0, 0, 1, 1], [], []>} : vector<8x512xbf16>, vector<512x512xbf16>, vector<8x512xf32> -> vector<8x512xf32>
    %12 = arith.truncf %11 : vector<8x512xf32> to vector<8x512xbf16>
    %cst_11 = arith.constant dense<0.000000e+00> : vector<8x512xf32>
    %13 = tpu.matmul %12, %3, %cst_11 {dimension_numbers = #tpu.dot_dimension_numbers<[1], [0], [0], [1], [0, 0, 1, 1], [], []>} : vector<8x512xbf16>, vector<512x512xbf16>, vector<8x512xf32> -> vector<8x512xf32>
    %14 = arith.addf %13, %6 : vector<8x512xf32>
    %cst_12 = arith.constant 0.000000e+00 : f32
    %15 = vector.broadcast %cst_12 : f32 to vector<8x512xf32>
    %16 = arith.maximumf %14, %15 : vector<8x512xf32>
    %17 = arith.truncf %16 : vector<8x512xf32> to vector<8x512xbf16>
    %cst_13 = arith.constant dense<0.000000e+00> : vector<8x512xf32>
    %18 = tpu.matmul %17, %2, %cst_13 {dimension_numbers = #tpu.dot_dimension_numbers<[1], [0], [0], [1], [0, 0, 1, 1], [], []>} : vector<8x512xbf16>, vector<512x512xbf16>, vector<8x512xf32> -> vector<8x512xf32>
    %19 = arith.truncf %18 : vector<8x512xf32> to vector<8x512xbf16>
    %cst_14 = arith.constant dense<0.000000e+00> : vector<8x512xf32>
    %20 = tpu.matmul %19, %3, %cst_14 {dimension_numbers = #tpu.dot_dimension_numbers<[1], [0], [0], [1], [0, 0, 1, 1], [], []>} : vector<8x512xbf16>, vector<512x512xbf16>, vector<8x512xf32> -> vector<8x512xf32>
    %21 = arith.addf %20, %6 : vector<8x512xf32>
    %cst_15 = arith.constant 0.000000e+00 : f32
    %22 = vector.broadcast %cst_15 : f32 to vector<8x512xf32>
    %23 = arith.maximumf %21, %22 : vector<8x512xf32>
    %c0_16 = arith.constant 0 : index
    %c0_17 = arith.constant 0 : index
    %24 = vector.load %arg6[%c0_16, %c0_17] : memref<8x512xf32, #tpu.memory_space<vmem>>, vector<8x512xf32>
    tpu.vector_store %arg6[%c0_16, %c0_17], %23 {strides = array<i32>} : memref<8x512xf32, #tpu.memory_space<vmem>>, vector<8x512xf32>,
    return
  }
  func.func @transform_0(%arg0: i32) -> (i32, i32) {
    %c0_i32 = arith.constant 0 : i32
    %c0_i32_0 = arith.constant 0 : i32
    return %arg0, %c0_i32 : i32, i32
  }
  func.func @transform_1(%arg0: i32) -> (i32, i32) {
    %c0_i32 = arith.constant 0 : i32
    %c0_i32_0 = arith.constant 0 : i32
    %c0_i32_1 = arith.constant 0 : i32
    return %c0_i32, %c0_i32_0 : i32, i32
  }
  func.func @transform_2(%arg0: i32) -> (i32, i32) {
    %c0_i32 = arith.constant 0 : i32
    %c0_i32_0 = arith.constant 0 : i32
    %c0_i32_1 = arith.constant 0 : i32
    return %c0_i32, %c0_i32_0 : i32, i32
  }
  func.func @transform_3(%arg0: i32) -> (i32, i32) {
    %c0_i32 = arith.constant 0 : i32
    %c0_i32_0 = arith.constant 0 : i32
    %c0_i32_1 = arith.constant 0 : i32
    return %c0_i32, %c0_i32_0 : i32, i32
  }
  func.func @transform_4(%arg0: i32) -> (i32, i32) {
    %c0_i32 = arith.constant 0 : i32
    %c0_i32_0 = arith.constant 0 : i32
    %c0_i32_1 = arith.constant 0 : i32
    return %c0_i32, %c0_i32_0 : i32, i32
  }
  func.func @transform_5(%arg0: i32) -> (i32, i32) {
    %c0_i32 = arith.constant 0 : i32
    %c0_i32_0 = arith.constant 0 : i32
    return %arg0, %c0_i32 : i32, i32
  }
}

</mosaic_0001>

<llo_original>
// kernel: tpu_custom_call.1
$region0: #{tpu_custom_call.1}
  #allocation0 [shape = 'u32[]', space=smem, size = 0x4, offset = 0x4, fixed_abs, tag = 'smem constant byte address 0x4 - core index']
  #allocation1 [shape = 'u32[144,128]{1,0:T(1,128)}', space=vmem, size = 0x12000, scoped, tag = 'internal scratch']
  %s0 = inlined_call_operand.hbm [shape: bf16[8,512], index: 0, kind: input, shape index: {}]
  %s1 = inlined_call_operand.hbm [shape: bf16[512,512], index: 1, kind: input, shape index: {}]
  %s2 = inlined_call_operand.hbm [shape: bf16[512,512], index: 2, kind: input, shape index: {}]
  %s3 = inlined_call_operand.hbm [shape: bf16[512,512], index: 3, kind: input, shape index: {}]
  %s4 = inlined_call_operand.vmem [shape: f32[1,512], index: 4, kind: input, shape index: {}]
  %s5 = inlined_call_operand.hbm [shape: f32[8,512], index: 5, kind: output, shape index: {}]
  %s6 = sld [smem:[#allocation0]]
  $region46: #{tpu_custom_call.1} parent=0
    _
  %s8 = ssub.s32 1, %s6
  %s9 = scalar_select 0, %s8, %s6
  $region1: #{tpu_custom_call.1} parent=0
    #allocation2 [shape = 'u8[8192]{0}', space=vmem, size = 0x2000, scoped, tag = 'input window, operand 0, single buffered']
    #allocation3 [shape = 's32[1]{0}', space=sflag, size = 0x4, scoped, tag = 'scoped memory for tpu_custom_call.1']
    #allocation4 [shape = 's32[1]{0}', space=sflag, size = 0x4, scoped, tag = 'scoped memory for tpu_custom_call.1']
    #allocation5 [shape = 'u8[524288]{0}', space=vmem, size = 0x80000, scoped, tag = 'input window, operand 1, single buffered']
    #allocation6 [shape = 's32[1]{0}', space=sflag, size = 0x4, scoped, tag = 'scoped memory for tpu_custom_call.1']
    #allocation7 [shape = 'u8[524288]{0}', space=vmem, size = 0x80000, scoped, tag = 'input window, operand 2, single buffered']
    #allocation8 [shape = 'u8[524288]{0}', space=vmem, size = 0x80000, scoped, tag = 'input window, operand 3, single buffered']
    #allocation9 [shape = 's32[1]{0}', space=sflag, size = 0x4, scoped, tag = 'scoped memory for tpu_custom_call.1']
    #allocation10 [shape = 'u8[16384]{0}', space=vmem, size = 0x4000, scoped, tag = 'output window, operand 0, single buffered']
    %10 = vsyncpa [#allocation3], 0
    %11 = vsyncpa [#allocation6], 0
    %12 = vsyncpa [#allocation9], 0
    %13 = vsyncpa [#allocation4], 0
    // Predicated region
    $region2: #{tpu_custom_call.1} parent=1 // pred_check
      _
    $region3: #{tpu_custom_call.1} parent=1 // pred_check_branch
      %15 = sbr.rel (0) target = $region5
    $region4: #{tpu_custom_call.1} parent=1 // pred_region
      %s17 = ssub.s32 256, 256
      %18 = vsyncadd [#allocation3], %s17
      %s20 = sshll.u32 [#allocation2], 4
      %s21 = int_to_ptr.vmem [resolvable:$true] %s20
      %23 = dma.hbm_to_vmem [thread:$0]  %s0, 256, %s21, [#allocation3]
    $region5: #{tpu_custom_call.1} parent=1 // pred_fallthru
      _
    // Predicated region
    $region6: #{tpu_custom_call.1} parent=1 // pred_check
      _
    $region7: #{tpu_custom_call.1} parent=1 // pred_check_branch
      %25 = sbr.rel (0) target = $region9
    $region8: #{tpu_custom_call.1} parent=1 // pred_region
      %s27 = ssub.s32 16384, 16384
      %28 = vsyncadd [#allocation6], %s27
      %s29 = sshll.u32 [#allocation5], 4
      %s30 = int_to_ptr.vmem [resolvable:$true] %s29
      %35 = dma.hbm_to_vmem [thread:$0]  %s1, 16384, %s30, [#allocation6], 256, 256, 16
    $region9: #{tpu_custom_call.1} parent=1 // pred_fallthru
      _
    // Predicated region
    $region10: #{tpu_custom_call.1} parent=1 // pred_check
      _
    $region11: #{tpu_custom_call.1} parent=1 // pred_check_branch
      %37 = sbr.rel (0) target = $region13
    $region12: #{tpu_custom_call.1} parent=1 // pred_region
      %s39 = ssub.s32 16384, 16384
      %40 = vsyncadd [#allocation6], %s39
      %s41 = sshll.u32 [#allocation7], 4
      %s42 = int_to_ptr.vmem [resolvable:$true] %s41
      %47 = dma.hbm_to_vmem [thread:$0]  %s2, 16384, %s42, [#allocation6], 256, 256, 16
    $region13: #{tpu_custom_call.1} parent=1 // pred_fallthru
      _
    // Predicated region
    $region14: #{tpu_custom_call.1} parent=1 // pred_check
      _
    $region15: #{tpu_custom_call.1} parent=1 // pred_check_branch
      %49 = sbr.rel (0) target = $region17
    $region16: #{tpu_custom_call.1} parent=1 // pred_region
      %s51 = ssub.s32 16384, 16384
      %52 = vsyncadd [#allocation9], %s51
      %s53 = sshll.u32 [#allocation8], 4
      %s54 = int_to_ptr.vmem [resolvable:$true] %s53
      %59 = dma.hbm_to_vmem [thread:$0]  %s3, 16384, %s54, [#allocation9], 256, 256, 16
    $region17: #{tpu_custom_call.1} parent=1 // pred_fallthru
      _
    // Predicated region
    $region18: #{tpu_custom_call.1} parent=1 // pred_check
      _
    $region19: #{tpu_custom_call.1} parent=1 // pred_check_branch
      %61 = sbr.rel (0) target = $region21
    $region20: #{tpu_custom_call.1} parent=1 // pred_region
      _
    $region21: #{tpu_custom_call.1} parent=1 // pred_fallthru
      _
    // Predicated region
    $region22: #{tpu_custom_call.1} parent=1 // pred_check
      _
    $region23: #{tpu_custom_call.1} parent=1 // pred_check_branch
      %63 = sbr.rel (0) target = $region25
    $region24: #{tpu_custom_call.1} parent=1 // pred_region
      %64 = dma.done [#allocation3], 256
    $region25: #{tpu_custom_call.1} parent=1 // pred_fallthru
      _
    // Predicated region
    $region26: #{tpu_custom_call.1} parent=1 // pred_check
      _
    $region27: #{tpu_custom_call.1} parent=1 // pred_check_branch
      %66 = sbr.rel (0) target = $region29
    $region28: #{tpu_custom_call.1} parent=1 // pred_region
      %67 = dma.done [#allocation6], 16384
    $region29: #{tpu_custom_call.1} parent=1 // pred_fallthru
      _
    // Predicated region
    $region30: #{tpu_custom_call.1} parent=1 // pred_check
      _
    $region31: #{tpu_custom_call.1} parent=1 // pred_check_branch
      %69 = sbr.rel (0) target = $region33
    $region32: #{tpu_custom_call.1} parent=1 // pred_region
      %70 = dma.done [#allocation6], 16384
    $region33: #{tpu_custom_call.1} parent=1 // pred_fallthru
      _
    // Predicated region
    $region34: #{tpu_custom_call.1} parent=1 // pred_check
      _
    $region35: #{tpu_custom_call.1} parent=1 // pred_check_branch
      %72 = sbr.rel (0) target = $region37
    $region36: #{tpu_custom_call.1} parent=1 // pred_region
      %73 = dma.done [#allocation9], 16384
    $region37: #{tpu_custom_call.1} parent=1 // pred_fallthru
      _
    %v74 = vld [vmem:[#allocation2] sm:$0xff]
    %v75 = vld [vmem:[#allocation2 + $0x8] sm:$0xff]
    %v76 = vld [vmem:[#allocation5] sm:$0xff]
    %v77 = vld [vmem:[#allocation5 + $0x8] sm:$0xff]
    %v78 = vld [vmem:[#allocation5 + $0x10] sm:$0xff]
    %v79 = vld [vmem:[#allocation5 + $0x18] sm:$0xff]
    %v80 = vld [vmem:[#allocation5 + $0x20] sm:$0xff]
    %v81 = vld [vmem:[#allocation5 + $0x28] sm:$0xff]
    %v82 = vld [vmem:[#allocation5 + $0x30] sm:$0xff]
    %v83 = vld [vmem:[#allocation5 + $0x38] sm:$0xff]
    %v84 = vld [vmem:[#allocation5 + $0x40] sm:$0xff]
    %v85 = vld [vmem:[#allocation5 + $0x48] sm:$0xff]
    %v86 = vld [vmem:[#allocation5 + $0x50] sm:$0xff]
    %v87 = vld [vmem:[#allocation5 + $0x58] sm:$0xff]
    %v88 = vld [vmem:[#allocation5 + $0x60] sm:$0xff]
    %v89 = vld [vmem:[#allocation5 + $0x68] sm:$0xff]
    %v90 = vld [vmem:[#allocation5 + $0x70] sm:$0xff]
    %v91 = vld [vmem:[#allocation5 + $0x78] sm:$0xff]
    %v92 = vld [vmem:[#allocation5 + $0x80] sm:$0xff]
    %v93 = vld [vmem:[#allocation5 + $0x88] sm:$0xff]
    %v94 = vld [vmem:[#allocation5 + $0x90] sm:$0xff]
    %v95 = vld [vmem:[#allocation5 + $0x98] sm:$0xff]
    %v96 = vld [vmem:[#allocation5 + $0xa0] sm:$0xff]
    %v97 = vld [vmem:[#allocation5 + $0xa8] sm:$0xff]
    %v98 = vld [vmem:[#allocation5 + $0xb0] sm:$0xff]
    %v99 = vld [vmem:[#allocation5 + $0xb8] sm:$0xff]
    %v100 = vld [vmem:[#allocation5 + $0xc0] sm:$0xff]
    %v101 = vld [vmem:[#allocation5 + $0xc8] sm:$0xff]
    %v102 = vld [vmem:[#allocation5 + $0xd0] sm:$0xff]
    %v103 = vld [vmem:[#allocation5 + $0xd8] sm:$0xff]
    %v104 = vld [vmem:[#allocation5 + $0xe0] sm:$0xff]
    %v105 = vld [vmem:[#allocation5 + $0xe8] sm:$0xff]
    %v106 = vld [vmem:[#allocation5 + $0xf0] sm:$0xff]
    %v107 = vld [vmem:[#allocation5 + $0xf8] sm:$0xff]
    %v108 = vld [vmem:[#allocation5 + $0x100] sm:$0xff]
    %v109 = vld [vmem:[#allocation5 + $0x108] sm:$0xff]
    %v110 = vld [vmem:[#allocation5 + $0x110] sm:$0xff]
    %v111 = vld [vmem:[#allocation5 + $0x118] sm:$0xff]
    %v112 = vld [vmem:[#allocation5 + $0x120] sm:$0xff]
    %v113 = vld [vmem:[#allocation5 + $0x128] sm:$0xff]
    %v114 = vld [vmem:[#allocation5 + $0x130] sm:$0xff]
    %v115 = vld [vmem:[#allocation5 + $0x138] sm:$0xff]
    %v116 = vld [vmem:[#allocation5 + $0x140] sm:$0xff]
    %v117 = vld [vmem:[#allocation5 + $0x148] sm:$0xff]
    %v118 = vld [vmem:[#allocation5 + $0x150] sm:$0xff]
    %v119 = vld [vmem:[#allocation5 + $0x158] sm:$0xff]
    %v120 = vld [vmem:[#allocation5 + $0x160] sm:$0xff]
    %v121 = vld [vmem:[#allocation5 + $0x168] sm:$0xff]
    %v122 = vld [vmem:[#allocation5 + $0x170] sm:$0xff]
    %v123 = vld [vmem:[#allocation5 + $0x178] sm:$0xff]
    %v124 = vld [vmem:[#allocation5 + $0x180] sm:$0xff]
    %v125 = vld [vmem:[#allocation5 + $0x188] sm:$0xff]
    %v126 = vld [vmem:[#allocation5 + $0x190] sm:$0xff]
    %v127 = vld [vmem:[#allocation5 + $0x198] sm:$0xff]
    %v128 = vld [vmem:[#allocation5 + $0x1a0] sm:$0xff]
    %v129 = vld [vmem:[#allocation5 + $0x1a8] sm:$0xff]
    %v130 = vld [vmem:[#allocation5 + $0x1b0] sm:$0xff]
    %v131 = vld [vmem:[#allocation5 + $0x1b8] sm:$0xff]
    %v132 = vld [vmem:[#allocation5 + $0x1c0] sm:$0xff]
    %v133 = vld [vmem:[#allocation5 + $0x1c8] sm:$0xff]
    %v134 = vld [vmem:[#allocation5 + $0x1d0] sm:$0xff]
    %v135 = vld [vmem:[#allocation5 + $0x1d8] sm:$0xff]
    %v136 = vld [vmem:[#allocation5 + $0x1e0] sm:$0xff]
    %v137 = vld [vmem:[#allocation5 + $0x1e8] sm:$0xff]
    %v138 = vld [vmem:[#allocation5 + $0x1f0] sm:$0xff]
    %v139 = vld [vmem:[#allocation5 + $0x1f8] sm:$0xff]
    %v140 = vld [vmem:[#allocation5 + $0x200] sm:$0xff]
    %v141 = vld [vmem:[#allocation5 + $0x208] sm:$0xff]
    %v142 = vld [vmem:[#allocation5 + $0x210] sm:$0xff]
    %v143 = vld [vmem:[#allocation5 + $0x218] sm:$0xff]
    %v144 = vld [vmem:[#allocation5 + $0x220] sm:$0xff]
    %v145 = vld [vmem:[#allocation5 + $0x228] sm:$0xff]
    %v146 = vld [vmem:[#allocation5 + $0x230] sm:$0xff]
    %v147 = vld [vmem:[#allocation5 + $0x238] sm:$0xff]
    %v148 = vld [vmem:[#allocation5 + $0x240] sm:$0xff]
    %v149 = vld [vmem:[#allocation5 + $0x248] sm:$0xff]
    %v150 = vld [vmem:[#allocation5 + $0x250] sm:$0xff]
    %v151 = vld [vmem:[#allocation5 + $0x258] sm:$0xff]
    %v152 = vld [vmem:[#allocation5 + $0x260] sm:$0xff]
    %v153 = vld [vmem:[#allocation5 + $0x268] sm:$0xff]
    %v154 = vld [vmem:[#allocation5 + $0x270] sm:$0xff]
    %v155 = vld [vmem:[#allocation5 + $0x278] sm:$0xff]
    %v156 = vld [vmem:[#allocation5 + $0x280] sm:$0xff]
    %v157 = vld [vmem:[#allocation5 + $0x288] sm:$0xff]
    %v158 = vld [vmem:[#allocation5 + $0x290] sm:$0xff]
    %v159 = vld [vmem:[#allocation5 + $0x298] sm:$0xff]
    %v160 = vld [vmem:[#allocation5 + $0x2a0] sm:$0xff]
    %v161 = vld [vmem:[#allocation5 + $0x2a8] sm:$0xff]
    %v162 = vld [vmem:[#allocation5 + $0x2b0] sm:$0xff]
    %v163 = vld [vmem:[#allocation5 + $0x2b8] sm:$0xff]
    %v164 = vld [vmem:[#allocation5 + $0x2c0] sm:$0xff]
    %v165 = vld [vmem:[#allocation5 + $0x2c8] sm:$0xff]
    %v166 = vld [vmem:[#allocation5 + $0x2d0] sm:$0xff]
    %v167 = vld [vmem:[#allocation5 + $0x2d8] sm:$0xff]
    %v168 = vld [vmem:[#allocation5 + $0x2e0] sm:$0xff]
    %v169 = vld [vmem:[#allocation5 + $0x2e8] sm:$0xff]
    %v170 = vld [vmem:[#allocation5 + $0x2f0] sm:$0xff]
    %v171 = vld [vmem:[#allocation5 + $0x2f8] sm:$0xff]
    %v172 = vld [vmem:[#allocation5 + $0x300] sm:$0xff]
    %v173 = vld [vmem:[#allocation5 + $0x308] sm:$0xff]
    %v174 = vld [vmem:[#allocation5 + $0x310] sm:$0xff]
    %v175 = vld [vmem:[#allocation5 + $0x318] sm:$0xff]
    %v176 = vld [vmem:[#allocation5 + $0x320] sm:$0xff]
    %v177 = vld [vmem:[#allocation5 + $0x328] sm:$0xff]
    %v178 = vld [vmem:[#allocation5 + $0x330] sm:$0xff]
    %v179 = vld [vmem:[#allocation5 + $0x338] sm:$0xff]
    %v180 = vld [vmem:[#allocation5 + $0x340] sm:$0xff]
    %v181 = vld [vmem:[#allocation5 + $0x348] sm:$0xff]
    %v182 = vld [vmem:[#allocation5 + $0x350] sm:$0xff]
    %v183 = vld [vmem:[#allocation5 + $0x358] sm:$0xff]
    %v184 = vld [vmem:[#allocation5 + $0x360] sm:$0xff]
    %v185 = vld [vmem:[#allocation5 + $0x368] sm:$0xff]
    %v186 = vld [vmem:[#allocation5 + $0x370] sm:$0xff]
    %v187 = vld [vmem:[#allocation5 + $0x378] sm:$0xff]
    %v188 = vld [vmem:[#allocation5 + $0x380] sm:$0xff]
    %v189 = vld [vmem:[#allocation5 + $0x388] sm:$0xff]
    %v190 = vld [vmem:[#allocation5 + $0x390] sm:$0xff]
    %v191 = vld [vmem:[#allocation5 + $0x398] sm:$0xff]
    %v192 = vld [vmem:[#allocation5 + $0x3a0] sm:$0xff]
    %v193 = vld [vmem:[#allocation5 + $0x3a8] sm:$0xff]
    %v194 = vld [vmem:[#allocation5 + $0x3b0] sm:$0xff]
    %v195 = vld [vmem:[#allocation5 + $0x3b8] sm:$0xff]
    %v196 = vld [vmem:[#allocation5 + $0x3c0] sm:$0xff]
    %v197 = vld [vmem:[#allocation5 + $0x3c8] sm:$0xff]
    %v198 = vld [vmem:[#allocation5 + $0x3d0] sm:$0xff]
    %v199 = vld [vmem:[#allocation5 + $0x3d8] sm:$0xff]
    %v200 = vld [vmem:[#allocation5 + $0x3e0] sm:$0xff]
    %v201 = vld [vmem:[#allocation5 + $0x3e8] sm:$0xff]
    %v202 = vld [vmem:[#allocation5 + $0x3f0] sm:$0xff]
    %v203 = vld [vmem:[#allocation5 + $0x3f8] sm:$0xff]
    %v204 = vld [vmem:[#allocation7] sm:$0xff]
    %v205 = vld [vmem:[#allocation7 + $0x8] sm:$0xff]
    %v206 = vld [vmem:[#allocation7 + $0x10] sm:$0xff]
    %v207 = vld [vmem:[#allocation7 + $0x18] sm:$0xff]
    %v208 = vld [vmem:[#allocation7 + $0x20] sm:$0xff]
    %v209 = vld [vmem:[#allocation7 + $0x28] sm:$0xff]
    %v210 = vld [vmem:[#allocation7 + $0x30] sm:$0xff]
    %v211 = vld [vmem:[#allocation7 + $0x38] sm:$0xff]
    %v212 = vld [vmem:[#allocation7 + $0x40] sm:$0xff]
    %v213 = vld [vmem:[#allocation7 + $0x48] sm:$0xff]
    %v214 = vld [vmem:[#allocation7 + $0x50] sm:$0xff]
    %v215 = vld [vmem:[#allocation7 + $0x58] sm:$0xff]
    %v216 = vld [vmem:[#allocation7 + $0x60] sm:$0xff]
    %v217 = vld [vmem:[#allocation7 + $0x68] sm:$0xff]
    %v218 = vld [vmem:[#allocation7 + $0x70] sm:$0xff]
    %v219 = vld [vmem:[#allocation7 + $0x78] sm:$0xff]
    %v220 = vld [vmem:[#allocation7 + $0x80] sm:$0xff]
    %v221 = vld [vmem:[#allocation7 + $0x88] sm:$0xff]
    %v222 = vld [vmem:[#allocation7 + $0x90] sm:$0xff]
    %v223 = vld [vmem:[#allocation7 + $0x98] sm:$0xff]
    %v224 = vld [vmem:[#allocation7 + $0xa0] sm:$0xff]
    %v225 = vld [vmem:[#allocation7 + $0xa8] sm:$0xff]
    %v226 = vld [vmem:[#allocation7 + $0xb0] sm:$0xff]
    %v227 = vld [vmem:[#allocation7 + $0xb8] sm:$0xff]
    %v228 = vld [vmem:[#allocation7 + $0xc0] sm:$0xff]
    %v229 = vld [vmem:[#allocation7 + $0xc8] sm:$0xff]
    %v230 = vld [vmem:[#allocation7 + $0xd0] sm:$0xff]
    %v231 = vld [vmem:[#allocation7 + $0xd8] sm:$0xff]
    %v232 = vld [vmem:[#allocation7 + $0xe0] sm:$0xff]
    %v233 = vld [vmem:[#allocation7 + $0xe8] sm:$0xff]
    %v234 = vld [vmem:[#allocation7 + $0xf0] sm:$0xff]
    %v235 = vld [vmem:[#allocation7 + $0xf8] sm:$0xff]
    %v236 = vld [vmem:[#allocation7 + $0x100] sm:$0xff]
    %v237 = vld [vmem:[#allocation7 + $0x108] sm:$0xff]
    %v238 = vld [vmem:[#allocation7 + $0x110] sm:$0xff]
    %v239 = vld [vmem:[#allocation7 + $0x118] sm:$0xff]
    %v240 = vld [vmem:[#allocation7 + $0x120] sm:$0xff]
    %v241 = vld [vmem:[#allocation7 + $0x128] sm:$0xff]
    %v242 = vld [vmem:[#allocation7 + $0x130] sm:$0xff]
    %v243 = vld [vmem:[#allocation7 + $0x138] sm:$0xff]
    %v244 = vld [vmem:[#allocation7 + $0x140] sm:$0xff]
    %v245 = vld [vmem:[#allocation7 + $0x148] sm:$0xff]
    %v246 = vld [vmem:[#allocation7 + $0x150] sm:$0xff]
    %v247 = vld [vmem:[#allocation7 + $0x158] sm:$0xff]
    %v248 = vld [vmem:[#allocation7 + $0x160] sm:$0xff]
    %v249 = vld [vmem:[#allocation7 + $0x168] sm:$0xff]
    %v250 = vld [vmem:[#allocation7 + $0x170] sm:$0xff]
    %v251 = vld [vmem:[#allocation7 + $0x178] sm:$0xff]
    %v252 = vld [vmem:[#allocation7 + $0x180] sm:$0xff]
    %v253 = vld [vmem:[#allocation7 + $0x188] sm:$0xff]
    %v254 = vld [vmem:[#allocation7 + $0x190] sm:$0xff]
    %v255 = vld [vmem:[#allocation7 + $0x198] sm:$0xff]
    %v256 = vld [vmem:[#allocation7 + $0x1a0] sm:$0xff]
    %v257 = vld [vmem:[#allocation7 + $0x1a8] sm:$0xff]
    %v258 = vld [vmem:[#allocation7 + $0x1b0] sm:$0xff]
    %v259 = vld [vmem:[#allocation7 + $0x1b8] sm:$0xff]
    %v260 = vld [vmem:[#allocation7 + $0x1c0] sm:$0xff]
    %v261 = vld [vmem:[#allocation7 + $0x1c8] sm:$0xff]
    %v262 = vld [vmem:[#allocation7 + $0x1d0] sm:$0xff]
    %v263 = vld [vmem:[#allocation7 + $0x1d8] sm:$0xff]
    %v264 = vld [vmem:[#allocation7 + $0x1e0] sm:$0xff]
    %v265 = vld [vmem:[#allocation7 + $0x1e8] sm:$0xff]
    %v266 = vld [vmem:[#allocation7 + $0x1f0] sm:$0xff]
    %v267 = vld [vmem:[#allocation7 + $0x1f8] sm:$0xff]
    %v268 = vld [vmem:[#allocation7 + $0x200] sm:$0xff]
    %v269 = vld [vmem:[#allocation7 + $0x208] sm:$0xff]
    %v270 = vld [vmem:[#allocation7 + $0x210] sm:$0xff]
    %v271 = vld [vmem:[#allocation7 + $0x218] sm:$0xff]
    %v272 = vld [vmem:[#allocation7 + $0x220] sm:$0xff]
    %v273 = vld [vmem:[#allocation7 + $0x228] sm:$0xff]
    %v274 = vld [vmem:[#allocation7 + $0x230] sm:$0xff]
    %v275 = vld [vmem:[#allocation7 + $0x238] sm:$0xff]
    %v276 = vld [vmem:[#allocation7 + $0x240] sm:$0xff]
    %v277 = vld [vmem:[#allocation7 + $0x248] sm:$0xff]
    %v278 = vld [vmem:[#allocation7 + $0x250] sm:$0xff]
    %v279 = vld [vmem:[#allocation7 + $0x258] sm:$0xff]
    %v280 = vld [vmem:[#allocation7 + $0x260] sm:$0xff]
    %v281 = vld [vmem:[#allocation7 + $0x268] sm:$0xff]
    %v282 = vld [vmem:[#allocation7 + $0x270] sm:$0xff]
    %v283 = vld [vmem:[#allocation7 + $0x278] sm:$0xff]
    %v284 = vld [vmem:[#allocation7 + $0x280] sm:$0xff]
    %v285 = vld [vmem:[#allocation7 + $0x288] sm:$0xff]
    %v286 = vld [vmem:[#allocation7 + $0x290] sm:$0xff]
    %v287 = vld [vmem:[#allocation7 + $0x298] sm:$0xff]
    %v288 = vld [vmem:[#allocation7 + $0x2a0] sm:$0xff]
    %v289 = vld [vmem:[#allocation7 + $0x2a8] sm:$0xff]
    %v290 = vld [vmem:[#allocation7 + $0x2b0] sm:$0xff]
    %v291 = vld [vmem:[#allocation7 + $0x2b8] sm:$0xff]
    %v292 = vld [vmem:[#allocation7 + $0x2c0] sm:$0xff]
    %v293 = vld [vmem:[#allocation7 + $0x2c8] sm:$0xff]
    %v294 = vld [vmem:[#allocation7 + $0x2d0] sm:$0xff]
    %v295 = vld [vmem:[#allocation7 + $0x2d8] sm:$0xff]
    %v296 = vld [vmem:[#allocation7 + $0x2e0] sm:$0xff]
    %v297 = vld [vmem:[#allocation7 + $0x2e8] sm:$0xff]
    %v298 = vld [vmem:[#allocation7 + $0x2f0] sm:$0xff]
    %v299 = vld [vmem:[#allocation7 + $0x2f8] sm:$0xff]
    %v300 = vld [vmem:[#allocation7 + $0x300] sm:$0xff]
    %v301 = vld [vmem:[#allocation7 + $0x308] sm:$0xff]
    %v302 = vld [vmem:[#allocation7 + $0x310] sm:$0xff]
    %v303 = vld [vmem:[#allocation7 + $0x318] sm:$0xff]
    %v304 = vld [vmem:[#allocation7 + $0x320] sm:$0xff]
    %v305 = vld [vmem:[#allocation7 + $0x328] sm:$0xff]
    %v306 = vld [vmem:[#allocation7 + $0x330] sm:$0xff]
    %v307 = vld [vmem:[#allocation7 + $0x338] sm:$0xff]
    %v308 = vld [vmem:[#allocation7 + $0x340] sm:$0xff]
    %v309 = vld [vmem:[#allocation7 + $0x348] sm:$0xff]
    %v310 = vld [vmem:[#allocation7 + $0x350] sm:$0xff]
    %v311 = vld [vmem:[#allocation7 + $0x358] sm:$0xff]
    %v312 = vld [vmem:[#allocation7 + $0x360] sm:$0xff]
    %v313 = vld [vmem:[#allocation7 + $0x368] sm:$0xff]
    %v314 = vld [vmem:[#allocation7 + $0x370] sm:$0xff]
    %v315 = vld [vmem:[#allocation7 + $0x378] sm:$0xff]
    %v316 = vld [vmem:[#allocation7 + $0x380] sm:$0xff]
    %v317 = vld [vmem:[#allocation7 + $0x388] sm:$0xff]
    %v318 = vld [vmem:[#allocation7 + $0x390] sm:$0xff]
    %v319 = vld [vmem:[#allocation7 + $0x398] sm:$0xff]
    %v320 = vld [vmem:[#allocation7 + $0x3a0] sm:$0xff]
    %v321 = vld [vmem:[#allocation7 + $0x3a8] sm:$0xff]
    %v322 = vld [vmem:[#allocation7 + $0x3b0] sm:$0xff]
    %v323 = vld [vmem:[#allocation7 + $0x3b8] sm:$0xff]
    %v324 = vld [vmem:[#allocation7 + $0x3c0] sm:$0xff]
    %v325 = vld [vmem:[#allocation7 + $0x3c8] sm:$0xff]
    %v326 = vld [vmem:[#allocation7 + $0x3d0] sm:$0xff]
    %v327 = vld [vmem:[#allocation7 + $0x3d8] sm:$0xff]
    %v328 = vld [vmem:[#allocation7 + $0x3e0] sm:$0xff]
    %v329 = vld [vmem:[#allocation7 + $0x3e8] sm:$0xff]
    %v330 = vld [vmem:[#allocation7 + $0x3f0] sm:$0xff]
    %v331 = vld [vmem:[#allocation7 + $0x3f8] sm:$0xff]
    %v332 = vld [vmem:[#allocation8] sm:$0xff]
    %v333 = vld [vmem:[#allocation8 + $0x8] sm:$0xff]
    %v334 = vld [vmem:[#allocation8 + $0x10] sm:$0xff]
    %v335 = vld [vmem:[#allocation8 + $0x18] sm:$0xff]
    %v336 = vld [vmem:[#allocation8 + $0x20] sm:$0xff]
    %v337 = vld [vmem:[#allocation8 + $0x28] sm:$0xff]
    %v338 = vld [vmem:[#allocation8 + $0x30] sm:$0xff]
    %v339 = vld [vmem:[#allocation8 + $0x38] sm:$0xff]
    %v340 = vld [vmem:[#allocation8 + $0x40] sm:$0xff]
    %v341 = vld [vmem:[#allocation8 + $0x48] sm:$0xff]
    %v342 = vld [vmem:[#allocation8 + $0x50] sm:$0xff]
    %v343 = vld [vmem:[#allocation8 + $0x58] sm:$0xff]
    %v344 = vld [vmem:[#allocation8 + $0x60] sm:$0xff]
    %v345 = vld [vmem:[#allocation8 + $0x68] sm:$0xff]
    %v346 = vld [vmem:[#allocation8 + $0x70] sm:$0xff]
    %v347 = vld [vmem:[#allocation8 + $0x78] sm:$0xff]
    %v348 = vld [vmem:[#allocation8 + $0x80] sm:$0xff]
    %v349 = vld [vmem:[#allocation8 + $0x88] sm:$0xff]
    %v350 = vld [vmem:[#allocation8 + $0x90] sm:$0xff]
    %v351 = vld [vmem:[#allocation8 + $0x98] sm:$0xff]
    %v352 = vld [vmem:[#allocation8 + $0xa0] sm:$0xff]
    %v353 = vld [vmem:[#allocation8 + $0xa8] sm:$0xff]
    %v354 = vld [vmem:[#allocation8 + $0xb0] sm:$0xff]
    %v355 = vld [vmem:[#allocation8 + $0xb8] sm:$0xff]
    %v356 = vld [vmem:[#allocation8 + $0xc0] sm:$0xff]
    %v357 = vld [vmem:[#allocation8 + $0xc8] sm:$0xff]
    %v358 = vld [vmem:[#allocation8 + $0xd0] sm:$0xff]
    %v359 = vld [vmem:[#allocation8 + $0xd8] sm:$0xff]
    %v360 = vld [vmem:[#allocation8 + $0xe0] sm:$0xff]
    %v361 = vld [vmem:[#allocation8 + $0xe8] sm:$0xff]
    %v362 = vld [vmem:[#allocation8 + $0xf0] sm:$0xff]
    %v363 = vld [vmem:[#allocation8 + $0xf8] sm:$0xff]
    %v364 = vld [vmem:[#allocation8 + $0x100] sm:$0xff]
    %v365 = vld [vmem:[#allocation8 + $0x108] sm:$0xff]
    %v366 = vld [vmem:[#allocation8 + $0x110] sm:$0xff]
    %v367 = vld [vmem:[#allocation8 + $0x118] sm:$0xff]
    %v368 = vld [vmem:[#allocation8 + $0x120] sm:$0xff]
    %v369 = vld [vmem:[#allocation8 + $0x128] sm:$0xff]
    %v370 = vld [vmem:[#allocation8 + $0x130] sm:$0xff]
    %v371 = vld [vmem:[#allocation8 + $0x138] sm:$0xff]
    %v372 = vld [vmem:[#allocation8 + $0x140] sm:$0xff]
    %v373 = vld [vmem:[#allocation8 + $0x148] sm:$0xff]
    %v374 = vld [vmem:[#allocation8 + $0x150] sm:$0xff]
    %v375 = vld [vmem:[#allocation8 + $0x158] sm:$0xff]
    %v376 = vld [vmem:[#allocation8 + $0x160] sm:$0xff]
    %v377 = vld [vmem:[#allocation8 + $0x168] sm:$0xff]
    %v378 = vld [vmem:[#allocation8 + $0x170] sm:$0xff]
    %v379 = vld [vmem:[#allocation8 + $0x178] sm:$0xff]
    %v380 = vld [vmem:[#allocation8 + $0x180] sm:$0xff]
    %v381 = vld [vmem:[#allocation8 + $0x188] sm:$0xff]
    %v382 = vld [vmem:[#allocation8 + $0x190] sm:$0xff]
    %v383 = vld [vmem:[#allocation8 + $0x198] sm:$0xff]
    %v384 = vld [vmem:[#allocation8 + $0x1a0] sm:$0xff]
    %v385 = vld [vmem:[#allocation8 + $0x1a8] sm:$0xff]
    %v386 = vld [vmem:[#allocation8 + $0x1b0] sm:$0xff]
    %v387 = vld [vmem:[#allocation8 + $0x1b8] sm:$0xff]
    %v388 = vld [vmem:[#allocation8 + $0x1c0] sm:$0xff]
    %v389 = vld [vmem:[#allocation8 + $0x1c8] sm:$0xff]
    %v390 = vld [vmem:[#allocation8 + $0x1d0] sm:$0xff]
    %v391 = vld [vmem:[#allocation8 + $0x1d8] sm:$0xff]
    %v392 = vld [vmem:[#allocation8 + $0x1e0] sm:$0xff]
    %v393 = vld [vmem:[#allocation8 + $0x1e8] sm:$0xff]
    %v394 = vld [vmem:[#allocation8 + $0x1f0] sm:$0xff]
    %v395 = vld [vmem:[#allocation8 + $0x1f8] sm:$0xff]
    %v396 = vld [vmem:[#allocation8 + $0x200] sm:$0xff]
    %v397 = vld [vmem:[#allocation8 + $0x208] sm:$0xff]
    %v398 = vld [vmem:[#allocation8 + $0x210] sm:$0xff]
    %v399 = vld [vmem:[#allocation8 + $0x218] sm:$0xff]
    %v400 = vld [vmem:[#allocation8 + $0x220] sm:$0xff]
    %v401 = vld [vmem:[#allocation8 + $0x228] sm:$0xff]
    %v402 = vld [vmem:[#allocation8 + $0x230] sm:$0xff]
    %v403 = vld [vmem:[#allocation8 + $0x238] sm:$0xff]
    %v404 = vld [vmem:[#allocation8 + $0x240] sm:$0xff]
    %v405 = vld [vmem:[#allocation8 + $0x248] sm:$0xff]
    %v406 = vld [vmem:[#allocation8 + $0x250] sm:$0xff]
    %v407 = vld [vmem:[#allocation8 + $0x258] sm:$0xff]
    %v408 = vld [vmem:[#allocation8 + $0x260] sm:$0xff]
    %v409 = vld [vmem:[#allocation8 + $0x268] sm:$0xff]
    %v410 = vld [vmem:[#allocation8 + $0x270] sm:$0xff]
    %v411 = vld [vmem:[#allocation8 + $0x278] sm:$0xff]
    %v412 = vld [vmem:[#allocation8 + $0x280] sm:$0xff]
    %v413 = vld [vmem:[#allocation8 + $0x288] sm:$0xff]
    %v414 = vld [vmem:[#allocation8 + $0x290] sm:$0xff]
    %v415 = vld [vmem:[#allocation8 + $0x298] sm:$0xff]
    %v416 = vld [vmem:[#allocation8 + $0x2a0] sm:$0xff]
    %v417 = vld [vmem:[#allocation8 + $0x2a8] sm:$0xff]
    %v418 = vld [vmem:[#allocation8 + $0x2b0] sm:$0xff]
    %v419 = vld [vmem:[#allocation8 + $0x2b8] sm:$0xff]
    %v420 = vld [vmem:[#allocation8 + $0x2c0] sm:$0xff]
    %v421 = vld [vmem:[#allocation8 + $0x2c8] sm:$0xff]
    %v422 = vld [vmem:[#allocation8 + $0x2d0] sm:$0xff]
    %v423 = vld [vmem:[#allocation8 + $0x2d8] sm:$0xff]
    %v424 = vld [vmem:[#allocation8 + $0x2e0] sm:$0xff]
    %v425 = vld [vmem:[#allocation8 + $0x2e8] sm:$0xff]
    %v426 = vld [vmem:[#allocation8 + $0x2f0] sm:$0xff]
    %v427 = vld [vmem:[#allocation8 + $0x2f8] sm:$0xff]
    %v428 = vld [vmem:[#allocation8 + $0x300] sm:$0xff]
    %v429 = vld [vmem:[#allocation8 + $0x308] sm:$0xff]
    %v430 = vld [vmem:[#allocation8 + $0x310] sm:$0xff]
    %v431 = vld [vmem:[#allocation8 + $0x318] sm:$0xff]
    %v432 = vld [vmem:[#allocation8 + $0x320] sm:$0xff]
    %v433 = vld [vmem:[#allocation8 + $0x328] sm:$0xff]
    %v434 = vld [vmem:[#allocation8 + $0x330] sm:$0xff]
    %v435 = vld [vmem:[#allocation8 + $0x338] sm:$0xff]
    %v436 = vld [vmem:[#allocation8 + $0x340] sm:$0xff]
    %v437 = vld [vmem:[#allocation8 + $0x348] sm:$0xff]
    %v438 = vld [vmem:[#allocation8 + $0x350] sm:$0xff]
    %v439 = vld [vmem:[#allocation8 + $0x358] sm:$0xff]
    %v440 = vld [vmem:[#allocation8 + $0x360] sm:$0xff]
    %v441 = vld [vmem:[#allocation8 + $0x368] sm:$0xff]
    %v442 = vld [vmem:[#allocation8 + $0x370] sm:$0xff]
    %v443 = vld [vmem:[#allocation8 + $0x378] sm:$0xff]
    %v444 = vld [vmem:[#allocation8 + $0x380] sm:$0xff]
    %v445 = vld [vmem:[#allocation8 + $0x388] sm:$0xff]
    %v446 = vld [vmem:[#allocation8 + $0x390] sm:$0xff]
    %v447 = vld [vmem:[#allocation8 + $0x398] sm:$0xff]
    %v448 = vld [vmem:[#allocation8 + $0x3a0] sm:$0xff]
    %v449 = vld [vmem:[#allocation8 + $0x3a8] sm:$0xff]
    %v450 = vld [vmem:[#allocation8 + $0x3b0] sm:$0xff]
    %v451 = vld [vmem:[#allocation8 + $0x3b8] sm:$0xff]
    %v452 = vld [vmem:[#allocation8 + $0x3c0] sm:$0xff]
    %v453 = vld [vmem:[#allocation8 + $0x3c8] sm:$0xff]
    %v454 = vld [vmem:[#allocation8 + $0x3d0] sm:$0xff]
    %v455 = vld [vmem:[#allocation8 + $0x3d8] sm:$0xff]
    %v456 = vld [vmem:[#allocation8 + $0x3e0] sm:$0xff]
    %v457 = vld [vmem:[#allocation8 + $0x3e8] sm:$0xff]
    %v458 = vld [vmem:[#allocation8 + $0x3f0] sm:$0xff]
    %v459 = vld [vmem:[#allocation8 + $0x3f8] sm:$0xff]
    %v460 = vld [vmem:[%s4] sm:$0xf]
    %v462 = vlaneseq
    %v463 = vshrl.u32 %v462, 7
    %v464 = vsub.s32 0, %v463
    %v465 = vrot.slane %v460, %v464
    %v466 = vlaneseq
    %v467 = vshrl.u32 %v466, 7
    %v468 = vsub.s32 1, %v467
    %v469 = vrot.slane %v460, %v468
    %v470 = vlaneseq
    %v471 = vshrl.u32 %v470, 7
    %v472 = vsub.s32 2, %v471
    %v473 = vrot.slane %v460, %v472
    %v474 = vlaneseq
    %v475 = vshrl.u32 %v474, 7
    %v476 = vsub.s32 3, %v475
    %v477 = vrot.slane %v460, %v476
    %v484 = vunpack.c.l.b16 %v74
    %v485 = vunpack.c.h.b16 %v74
    %v486 = vunpack.c.l.b16 %v75
    %v487 = vunpack.c.h.b16 %v75
    %v488 = vpack.c.b16 %v484, %v484
    %v489 = vpack.c.b16 %v485, %v485
    %v490 = vpack.c.b16 %v486, %v486
    %v491 = vpack.c.b16 %v487, %v487
    %v624 = vunpack.c.l.b16 %v76
    %v625 = vunpack.c.h.b16 %v76
    %v626 = vunpack.c.l.b16 %v77
    %v627 = vunpack.c.h.b16 %v77
    %v628 = vunpack.c.l.b16 %v78
    %v629 = vunpack.c.h.b16 %v78
    %v630 = vunpack.c.l.b16 %v79
    %v631 = vunpack.c.h.b16 %v79
    %v632 = vunpack.c.l.b16 %v80
    %v633 = vunpack.c.h.b16 %v80
    %v634 = vunpack.c.l.b16 %v81
    %v635 = vunpack.c.h.b16 %v81
    %v636 = vunpack.c.l.b16 %v82
    %v637 = vunpack.c.h.b16 %v82
    %v638 = vunpack.c.l.b16 %v83
    %v639 = vunpack.c.h.b16 %v83
    %v640 = vunpack.c.l.b16 %v84
    %v641 = vunpack.c.h.b16 %v84
    %v642 = vunpack.c.l.b16 %v85
    %v643 = vunpack.c.h.b16 %v85
    %v644 = vunpack.c.l.b16 %v86
    %v645 = vunpack.c.h.b16 %v86
    %v646 = vunpack.c.l.b16 %v87
    %v647 = vunpack.c.h.b16 %v87
    %v648 = vunpack.c.l.b16 %v88
    %v649 = vunpack.c.h.b16 %v88
    %v650 = vunpack.c.l.b16 %v89
    %v651 = vunpack.c.h.b16 %v89
    %v652 = vunpack.c.l.b16 %v90
    %v653 = vunpack.c.h.b16 %v90
    %v654 = vunpack.c.l.b16 %v91
    %v655 = vunpack.c.h.b16 %v91
    %v656 = vunpack.c.l.b16 %v92
    %v657 = vunpack.c.h.b16 %v92
    %v658 = vunpack.c.l.b16 %v93
    %v659 = vunpack.c.h.b16 %v93
    %v660 = vunpack.c.l.b16 %v94
    %v661 = vunpack.c.h.b16 %v94
    %v662 = vunpack.c.l.b16 %v95
    %v663 = vunpack.c.h.b16 %v95
    %v664 = vunpack.c.l.b16 %v96
    %v665 = vunpack.c.h.b16 %v96
    %v666 = vunpack.c.l.b16 %v97
    %v667 = vunpack.c.h.b16 %v97
    %v668 = vunpack.c.l.b16 %v98
    %v669 = vunpack.c.h.b16 %v98
    %v670 = vunpack.c.l.b16 %v99
    %v671 = vunpack.c.h.b16 %v99
    %v672 = vunpack.c.l.b16 %v100
    %v673 = vunpack.c.h.b16 %v100
    %v674 = vunpack.c.l.b16 %v101
    %v675 = vunpack.c.h.b16 %v101
    %v676 = vunpack.c.l.b16 %v102
    %v677 = vunpack.c.h.b16 %v102
    %v678 = vunpack.c.l.b16 %v103
    %v679 = vunpack.c.h.b16 %v103
    %v680 = vunpack.c.l.b16 %v104
    %v681 = vunpack.c.h.b16 %v104
    %v682 = vunpack.c.l.b16 %v105
    %v683 = vunpack.c.h.b16 %v105
    %v684 = vunpack.c.l.b16 %v106
    %v685 = vunpack.c.h.b16 %v106
    %v686 = vunpack.c.l.b16 %v107
    %v687 = vunpack.c.h.b16 %v107
    %v688 = vunpack.c.l.b16 %v108
    %v689 = vunpack.c.h.b16 %v108
    %v690 = vunpack.c.l.b16 %v109
    %v691 = vunpack.c.h.b16 %v109
    %v692 = vunpack.c.l.b16 %v110
    %v693 = vunpack.c.h.b16 %v110
    %v694 = vunpack.c.l.b16 %v111
    %v695 = vunpack.c.h.b16 %v111
    %v696 = vunpack.c.l.b16 %v112
    %v697 = vunpack.c.h.b16 %v112
    %v698 = vunpack.c.l.b16 %v113
    %v699 = vunpack.c.h.b16 %v113
    %v700 = vunpack.c.l.b16 %v114
    %v701 = vunpack.c.h.b16 %v114
    %v702 = vunpack.c.l.b16 %v115
    %v703 = vunpack.c.h.b16 %v115
    %v704 = vunpack.c.l.b16 %v116
    %v705 = vunpack.c.h.b16 %v116
    %v706 = vunpack.c.l.b16 %v117
    %v707 = vunpack.c.h.b16 %v117
    %v708 = vunpack.c.l.b16 %v118
    %v709 = vunpack.c.h.b16 %v118
    %v710 = vunpack.c.l.b16 %v119
    %v711 = vunpack.c.h.b16 %v119
    %v712 = vunpack.c.l.b16 %v120
    %v713 = vunpack.c.h.b16 %v120
    %v714 = vunpack.c.l.b16 %v121
    %v715 = vunpack.c.h.b16 %v121
    %v716 = vunpack.c.l.b16 %v122
    %v717 = vunpack.c.h.b16 %v122
    %v718 = vunpack.c.l.b16 %v123
    %v719 = vunpack.c.h.b16 %v123
    %v720 = vunpack.c.l.b16 %v124
    %v721 = vunpack.c.h.b16 %v124
    %v722 = vunpack.c.l.b16 %v125
    %v723 = vunpack.c.h.b16 %v125
    %v724 = vunpack.c.l.b16 %v126
    %v725 = vunpack.c.h.b16 %v126
    %v726 = vunpack.c.l.b16 %v127
    %v727 = vunpack.c.h.b16 %v127
    %v728 = vunpack.c.l.b16 %v128
    %v729 = vunpack.c.h.b16 %v128
    %v730 = vunpack.c.l.b16 %v129
    %v731 = vunpack.c.h.b16 %v129
    %v732 = vunpack.c.l.b16 %v130
    %v733 = vunpack.c.h.b16 %v130
    %v734 = vunpack.c.l.b16 %v131
    %v735 = vunpack.c.h.b16 %v131
    %v736 = vunpack.c.l.b16 %v132
    %v737 = vunpack.c.h.b16 %v132
    %v738 = vunpack.c.l.b16 %v133
    %v739 = vunpack.c.h.b16 %v133
    %v740 = vunpack.c.l.b16 %v134
    %v741 = vunpack.c.h.b16 %v134
    %v742 = vunpack.c.l.b16 %v135
    %v743 = vunpack.c.h.b16 %v135
    %v744 = vunpack.c.l.b16 %v136
    %v745 = vunpack.c.h.b16 %v136
    %v746 = vunpack.c.l.b16 %v137
    %v747 = vunpack.c.h.b16 %v137
    %v748 = vunpack.c.l.b16 %v138
    %v749 = vunpack.c.h.b16 %v138
    %v750 = vunpack.c.l.b16 %v139
    %v751 = vunpack.c.h.b16 %v139
    %v752 = vunpack.c.l.b16 %v140
    %v753 = vunpack.c.h.b16 %v140
    %v754 = vunpack.c.l.b16 %v141
    %v755 = vunpack.c.h.b16 %v141
    %v756 = vunpack.c.l.b16 %v142
    %v757 = vunpack.c.h.b16 %v142
    %v758 = vunpack.c.l.b16 %v143
    %v759 = vunpack.c.h.b16 %v143
    %v760 = vunpack.c.l.b16 %v144
    %v761 = vunpack.c.h.b16 %v144
    %v762 = vunpack.c.l.b16 %v145
    %v763 = vunpack.c.h.b16 %v145
    %v764 = vunpack.c.l.b16 %v146
    %v765 = vunpack.c.h.b16 %v146
    %v766 = vunpack.c.l.b16 %v147
    %v767 = vunpack.c.h.b16 %v147
    %v768 = vunpack.c.l.b16 %v148
    %v769 = vunpack.c.h.b16 %v148
    %v770 = vunpack.c.l.b16 %v149
    %v771 = vunpack.c.h.b16 %v149
    %v772 = vunpack.c.l.b16 %v150
    %v773 = vunpack.c.h.b16 %v150
    %v774 = vunpack.c.l.b16 %v151
    %v775 = vunpack.c.h.b16 %v151
    %v776 = vunpack.c.l.b16 %v152
    %v777 = vunpack.c.h.b16 %v152
    %v778 = vunpack.c.l.b16 %v153
    %v779 = vunpack.c.h.b16 %v153
    %v780 = vunpack.c.l.b16 %v154
    %v781 = vunpack.c.h.b16 %v154
    %v782 = vunpack.c.l.b16 %v155
    %v783 = vunpack.c.h.b16 %v155
    %v784 = vunpack.c.l.b16 %v156
    %v785 = vunpack.c.h.b16 %v156
    %v786 = vunpack.c.l.b16 %v157
    %v787 = vunpack.c.h.b16 %v157
    %v788 = vunpack.c.l.b16 %v158
    %v789 = vunpack.c.h.b16 %v158
    %v790 = vunpack.c.l.b16 %v159
    %v791 = vunpack.c.h.b16 %v159
    %v792 = vunpack.c.l.b16 %v160
    %v793 = vunpack.c.h.b16 %v160
    %v794 = vunpack.c.l.b16 %v161
    %v795 = vunpack.c.h.b16 %v161
    %v796 = vunpack.c.l.b16 %v162
    %v797 = vunpack.c.h.b16 %v162
    %v798 = vunpack.c.l.b16 %v163
    %v799 = vunpack.c.h.b16 %v163
    %v800 = vunpack.c.l.b16 %v164
    %v801 = vunpack.c.h.b16 %v164
    %v802 = vunpack.c.l.b16 %v165
    %v803 = vunpack.c.h.b16 %v165
    %v804 = vunpack.c.l.b16 %v166
    %v805 = vunpack.c.h.b16 %v166
    %v806 = vunpack.c.l.b16 %v167
    %v807 = vunpack.c.h.b16 %v167
    %v808 = vunpack.c.l.b16 %v168
    %v809 = vunpack.c.h.b16 %v168
    %v810 = vunpack.c.l.b16 %v169
    %v811 = vunpack.c.h.b16 %v169
    %v812 = vunpack.c.l.b16 %v170
    %v813 = vunpack.c.h.b16 %v170
    %v814 = vunpack.c.l.b16 %v171
    %v815 = vunpack.c.h.b16 %v171
    %v816 = vunpack.c.l.b16 %v172
    %v817 = vunpack.c.h.b16 %v172
    %v818 = vunpack.c.l.b16 %v173
    %v819 = vunpack.c.h.b16 %v173
    %v820 = vunpack.c.l.b16 %v174
    %v821 = vunpack.c.h.b16 %v174
    %v822 = vunpack.c.l.b16 %v175
    %v823 = vunpack.c.h.b16 %v175
    %v824 = vunpack.c.l.b16 %v176
    %v825 = vunpack.c.h.b16 %v176
    %v826 = vunpack.c.l.b16 %v177
    %v827 = vunpack.c.h.b16 %v177
    %v828 = vunpack.c.l.b16 %v178
    %v829 = vunpack.c.h.b16 %v178
    %v830 = vunpack.c.l.b16 %v179
    %v831 = vunpack.c.h.b16 %v179
    %v832 = vunpack.c.l.b16 %v180
    %v833 = vunpack.c.h.b16 %v180
    %v834 = vunpack.c.l.b16 %v181
    %v835 = vunpack.c.h.b16 %v181
    %v836 = vunpack.c.l.b16 %v182
    %v837 = vunpack.c.h.b16 %v182
    %v838 = vunpack.c.l.b16 %v183
    %v839 = vunpack.c.h.b16 %v183
    %v840 = vunpack.c.l.b16 %v184
    %v841 = vunpack.c.h.b16 %v184
    %v842 = vunpack.c.l.b16 %v185
    %v843 = vunpack.c.h.b16 %v185
    %v844 = vunpack.c.l.b16 %v186
    %v845 = vunpack.c.h.b16 %v186
    %v846 = vunpack.c.l.b16 %v187
    %v847 = vunpack.c.h.b16 %v187
    %v848 = vunpack.c.l.b16 %v188
    %v849 = vunpack.c.h.b16 %v188
    %v850 = vunpack.c.l.b16 %v189
    %v851 = vunpack.c.h.b16 %v189
    %v852 = vunpack.c.l.b16 %v190
    %v853 = vunpack.c.h.b16 %v190
    %v854 = vunpack.c.l.b16 %v191
    %v855 = vunpack.c.h.b16 %v191
    %v856 = vunpack.c.l.b16 %v192
    %v857 = vunpack.c.h.b16 %v192
    %v858 = vunpack.c.l.b16 %v193
    %v859 = vunpack.c.h.b16 %v193
    %v860 = vunpack.c.l.b16 %v194
    %v861 = vunpack.c.h.b16 %v194
    %v862 = vunpack.c.l.b16 %v195
    %v863 = vunpack.c.h.b16 %v195
    %v864 = vunpack.c.l.b16 %v196
    %v865 = vunpack.c.h.b16 %v196
    %v866 = vunpack.c.l.b16 %v197
    %v867 = vunpack.c.h.b16 %v197
    %v868 = vunpack.c.l.b16 %v198
    %v869 = vunpack.c.h.b16 %v198
    %v870 = vunpack.c.l.b16 %v199
    %v871 = vunpack.c.h.b16 %v199
    %v872 = vunpack.c.l.b16 %v200
    %v873 = vunpack.c.h.b16 %v200
    %v874 = vunpack.c.l.b16 %v201
    %v875 = vunpack.c.h.b16 %v201
    %v876 = vunpack.c.l.b16 %v202
    %v877 = vunpack.c.h.b16 %v202
    %v878 = vunpack.c.l.b16 %v203
    %v879 = vunpack.c.h.b16 %v203
    %v880 = vpack.c.b16 %v628, %v624
    %v881 = vpack.c.b16 %v629, %v625
    %v882 = vpack.c.b16 %v630, %v626
    %v883 = vpack.c.b16 %v631, %v627
    %v884 = vpack.c.b16 %v636, %v632
    %v885 = vpack.c.b16 %v637, %v633
    %v886 = vpack.c.b16 %v638, %v634
    %v887 = vpack.c.b16 %v639, %v635
    %v888 = vpack.c.b16 %v644, %v640
    %v889 = vpack.c.b16 %v645, %v641
    %v890 = vpack.c.b16 %v646, %v642
    %v891 = vpack.c.b16 %v647, %v643
    %v892 = vpack.c.b16 %v652, %v648
    %v893 = vpack.c.b16 %v653, %v649
    %v894 = vpack.c.b16 %v654, %v650
    %v895 = vpack.c.b16 %v655, %v651
    %v896 = vpack.c.b16 %v660, %v656
    %v897 = vpack.c.b16 %v661, %v657
    %v898 = vpack.c.b16 %v662, %v658
    %v899 = vpack.c.b16 %v663, %v659
    %v900 = vpack.c.b16 %v668, %v664
    %v901 = vpack.c.b16 %v669, %v665
    %v902 = vpack.c.b16 %v670, %v666
    %v903 = vpack.c.b16 %v671, %v667
    %v904 = vpack.c.b16 %v676, %v672
    %v905 = vpack.c.b16 %v677, %v673
    %v906 = vpack.c.b16 %v678, %v674
    %v907 = vpack.c.b16 %v679, %v675
    %v908 = vpack.c.b16 %v684, %v680
    %v909 = vpack.c.b16 %v685, %v681
    %v910 = vpack.c.b16 %v686, %v682
    %v911 = vpack.c.b16 %v687, %v683
    %v912 = vpack.c.b16 %v692, %v688
    %v913 = vpack.c.b16 %v693, %v689
    %v914 = vpack.c.b16 %v694, %v690
    %v915 = vpack.c.b16 %v695, %v691
    %v916 = vpack.c.b16 %v700, %v696
    %v917 = vpack.c.b16 %v701, %v697
    %v918 = vpack.c.b16 %v702, %v698
    %v919 = vpack.c.b16 %v703, %v699
    %v920 = vpack.c.b16 %v708, %v704
    %v921 = vpack.c.b16 %v709, %v705
    %v922 = vpack.c.b16 %v710, %v706
    %v923 = vpack.c.b16 %v711, %v707
    %v924 = vpack.c.b16 %v716, %v712
    %v925 = vpack.c.b16 %v717, %v713
    %v926 = vpack.c.b16 %v718, %v714
    %v927 = vpack.c.b16 %v719, %v715
    %v928 = vpack.c.b16 %v724, %v720
    %v929 = vpack.c.b16 %v725, %v721
    %v930 = vpack.c.b16 %v726, %v722
    %v931 = vpack.c.b16 %v727, %v723
    %v932 = vpack.c.b16 %v732, %v728
    %v933 = vpack.c.b16 %v733, %v729
    %v934 = vpack.c.b16 %v734, %v730
    %v935 = vpack.c.b16 %v735, %v731
    %v936 = vpack.c.b16 %v740, %v736
    %v937 = vpack.c.b16 %v741, %v737
    %v938 = vpack.c.b16 %v742, %v738
    %v939 = vpack.c.b16 %v743, %v739
    %v940 = vpack.c.b16 %v748, %v744
    %v941 = vpack.c.b16 %v749, %v745
    %v942 = vpack.c.b16 %v750, %v746
    %v943 = vpack.c.b16 %v751, %v747
    %v944 = vpack.c.b16 %v756, %v752
    %v945 = vpack.c.b16 %v757, %v753
    %v946 = vpack.c.b16 %v758, %v754
    %v947 = vpack.c.b16 %v759, %v755
    %v948 = vpack.c.b16 %v764, %v760
    %v949 = vpack.c.b16 %v765, %v761
    %v950 = vpack.c.b16 %v766, %v762
    %v951 = vpack.c.b16 %v767, %v763
    %v952 = vpack.c.b16 %v772, %v768
    %v953 = vpack.c.b16 %v773, %v769
    %v954 = vpack.c.b16 %v774, %v770
    %v955 = vpack.c.b16 %v775, %v771
    %v956 = vpack.c.b16 %v780, %v776
    %v957 = vpack.c.b16 %v781, %v777
    %v958 = vpack.c.b16 %v782, %v778
    %v959 = vpack.c.b16 %v783, %v779
    %v960 = vpack.c.b16 %v788, %v784
    %v961 = vpack.c.b16 %v789, %v785
    %v962 = vpack.c.b16 %v790, %v786
    %v963 = vpack.c.b16 %v791, %v787
    %v964 = vpack.c.b16 %v796, %v792
    %v965 = vpack.c.b16 %v797, %v793
    %v966 = vpack.c.b16 %v798, %v794
    %v967 = vpack.c.b16 %v799, %v795
    %v968 = vpack.c.b16 %v804, %v800
    %v969 = vpack.c.b16 %v805, %v801
    %v970 = vpack.c.b16 %v806, %v802
    %v971 = vpack.c.b16 %v807, %v803
    %v972 = vpack.c.b16 %v812, %v808
    %v973 = vpack.c.b16 %v813, %v809
    %v974 = vpack.c.b16 %v814, %v810
    %v975 = vpack.c.b16 %v815, %v811
    %v976 = vpack.c.b16 %v820, %v816
    %v977 = vpack.c.b16 %v821, %v817
    %v978 = vpack.c.b16 %v822, %v818
    %v979 = vpack.c.b16 %v823, %v819
    %v980 = vpack.c.b16 %v828, %v824
    %v981 = vpack.c.b16 %v829, %v825
    %v982 = vpack.c.b16 %v830, %v826
    %v983 = vpack.c.b16 %v831, %v827
    %v984 = vpack.c.b16 %v836, %v832
    %v985 = vpack.c.b16 %v837, %v833
    %v986 = vpack.c.b16 %v838, %v834
    %v987 = vpack.c.b16 %v839, %v835
    %v988 = vpack.c.b16 %v844, %v840
    %v989 = vpack.c.b16 %v845, %v841
    %v990 = vpack.c.b16 %v846, %v842
    %v991 = vpack.c.b16 %v847, %v843
    %v992 = vpack.c.b16 %v852, %v848
    %v993 = vpack.c.b16 %v853, %v849
    %v994 = vpack.c.b16 %v854, %v850
    %v995 = vpack.c.b16 %v855, %v851
    %v996 = vpack.c.b16 %v860, %v856
    %v997 = vpack.c.b16 %v861, %v857
    %v998 = vpack.c.b16 %v862, %v858
    %v999 = vpack.c.b16 %v863, %v859
    %v1000 = vpack.c.b16 %v868, %v864
    %v1001 = vpack.c.b16 %v869, %v865
    %v1002 = vpack.c.b16 %v870, %v866
    %v1003 = vpack.c.b16 %v871, %v867
    %v1004 = vpack.c.b16 %v876, %v872
    %v1005 = vpack.c.b16 %v877, %v873
    %v1006 = vpack.c.b16 %v878, %v874
    %v1007 = vpack.c.b16 %v879, %v875
    %1136 = vmatprep.subr.bf16.mxu0 %v881
    %1137 = vmatpush1.bf16.msra.mxu0 %v880
    %1138 = vmatprep.subr.bf16.mxu0 %v885
    %1139 = vmatpush1.bf16.msra.mxu0 %v884
    %1140 = vmatprep.subr.bf16.mxu0 %v889
    %1141 = vmatpush1.bf16.msra.mxu0 %v888
    %1142 = vmatprep.subr.bf16.mxu0 %v893
    %1143 = vmatpush1.bf16.msra.mxu0 %v892
    %1144 = vmatprep.subr.bf16.mxu0 %v897
    %1145 = vmatpush1.bf16.msra.mxu0 %v896
    %1146 = vmatprep.subr.bf16.mxu0 %v901
    %1147 = vmatpush1.bf16.msra.mxu0 %v900
    %1148 = vmatprep.subr.bf16.mxu0 %v905
    %1149 = vmatpush1.bf16.msra.mxu0 %v904
    %1150 = vmatprep.subr.bf16.mxu0 %v909
    %1151 = vmatpush1.bf16.msra.mxu0 %v908
    %1152 = vmatprep.subr.bf16.mxu0 %v913
    %1153 = vmatpush1.bf16.msra.mxu0 %v912
    %1154 = vmatprep.subr.bf16.mxu0 %v917
    %1155 = vmatpush1.bf16.msra.mxu0 %v916
    %1156 = vmatprep.subr.bf16.mxu0 %v921
    %1157 = vmatpush1.bf16.msra.mxu0 %v920
    %1158 = vmatprep.subr.bf16.mxu0 %v925
    %1159 = vmatpush1.bf16.msra.mxu0 %v924
    %1160 = vmatprep.subr.bf16.mxu0 %v929
    %1161 = vmatpush1.bf16.msra.mxu0 %v928
    %1162 = vmatprep.subr.bf16.mxu0 %v933
    %1163 = vmatpush1.bf16.msra.mxu0 %v932
    %1164 = vmatprep.subr.bf16.mxu0 %v937
    %1165 = vmatpush1.bf16.msra.mxu0 %v936
    %1166 = vmatprep.subr.bf16.mxu0 %v941
    %1167 = vmatpush1.bf16.msra.mxu0 %v940
    %1168 = vmatprep.mubr.bf16.mxu0 %v489
    %1169 = vmatmul.mubr.bf16.gmra.mrb[0].mxu0 %v488
    %v1170 = vpop.f32.mrb[0].mxu0
    %v1171 = vadd.f32 0.0, %v1170
    %v1172 = vpop.f32.mrb[0].mxu0
    %v1173 = vadd.f32 0.0, %v1172
    %v1174 = vpop.f32.mrb[0].mxu0
    %v1175 = vpop.f32.mrb[0].mxu0
    %1176 = vdwg.mxu0
    %1177 = vmatprep.subr.bf16.mxu0 %v945
    %1178 = vmatpush1.bf16.msra.mxu0 %v944
    %1179 = vmatprep.subr.bf16.mxu0 %v949
    %1180 = vmatpush1.bf16.msra.mxu0 %v948
    %1181 = vmatprep.subr.bf16.mxu0 %v953
    %1182 = vmatpush1.bf16.msra.mxu0 %v952
    %1183 = vmatprep.subr.bf16.mxu0 %v957
    %1184 = vmatpush1.bf16.msra.mxu0 %v956
    %1185 = vmatprep.subr.bf16.mxu0 %v961
    %1186 = vmatpush1.bf16.msra.mxu0 %v960
    %1187 = vmatprep.subr.bf16.mxu0 %v965
    %1188 = vmatpush1.bf16.msra.mxu0 %v964
    %1189 = vmatprep.subr.bf16.mxu0 %v969
    %1190 = vmatpush1.bf16.msra.mxu0 %v968
    %1191 = vmatprep.subr.bf16.mxu0 %v973
    %1192 = vmatpush1.bf16.msra.mxu0 %v972
    %1193 = vmatprep.subr.bf16.mxu0 %v977
    %1194 = vmatpush1.bf16.msra.mxu0 %v976
    %1195 = vmatprep.subr.bf16.mxu0 %v981
    %1196 = vmatpush1.bf16.msra.mxu0 %v980
    %1197 = vmatprep.subr.bf16.mxu0 %v985
    %1198 = vmatpush1.bf16.msra.mxu0 %v984
    %1199 = vmatprep.subr.bf16.mxu0 %v989
    %1200 = vmatpush1.bf16.msra.mxu0 %v988
    %1201 = vmatprep.subr.bf16.mxu0 %v993
    %1202 = vmatpush1.bf16.msra.mxu0 %v992
    %1203 = vmatprep.subr.bf16.mxu0 %v997
    %1204 = vmatpush1.bf16.msra.mxu0 %v996
    %1205 = vmatprep.subr.bf16.mxu0 %v1001
    %1206 = vmatpush1.bf16.msra.mxu0 %v1000
    %1207 = vmatprep.subr.bf16.mxu0 %v1005
    %1208 = vmatpush1.bf16.msra.mxu0 %v1004
    %1209 = vmatprep.mubr.bf16.mxu0 %v491
    %1210 = vmatmul.mubr.bf16.gmra.mrb[0].mxu0 %v490
    %v1211 = vpop.f32.mrb[0].mxu0
    %v1212 = vadd.f32 %v1171, %v1211
    %v1213 = vpop.f32.mrb[0].mxu0
    %v1214 = vadd.f32 %v1173, %v1213
    %v1215 = vpop.f32.mrb[0].mxu0
    %v1216 = vpop.f32.mrb[0].mxu0
    %1217 = vdwg.mxu0
    %1218 = vmatprep.subr.bf16.mxu0 %v883
    %1219 = vmatpush1.bf16.msra.mxu0 %v882
    %1220 = vmatprep.subr.bf16.mxu0 %v887
    %1221 = vmatpush1.bf16.msra.mxu0 %v886
    %1222 = vmatprep.subr.bf16.mxu0 %v891
    %1223 = vmatpush1.bf16.msra.mxu0 %v890
    %1224 = vmatprep.subr.bf16.mxu0 %v895
    %1225 = vmatpush1.bf16.msra.mxu0 %v894
    %1226 = vmatprep.subr.bf16.mxu0 %v899
    %1227 = vmatpush1.bf16.msra.mxu0 %v898
    %1228 = vmatprep.subr.bf16.mxu0 %v903
    %1229 = vmatpush1.bf16.msra.mxu0 %v902
    %1230 = vmatprep.subr.bf16.mxu0 %v907
    %1231 = vmatpush1.bf16.msra.mxu0 %v906
    %1232 = vmatprep.subr.bf16.mxu0 %v911
    %1233 = vmatpush1.bf16.msra.mxu0 %v910
    %1234 = vmatprep.subr.bf16.mxu0 %v915
    %1235 = vmatpush1.bf16.msra.mxu0 %v914
    %1236 = vmatprep.subr.bf16.mxu0 %v919
    %1237 = vmatpush1.bf16.msra.mxu0 %v918
    %1238 = vmatprep.subr.bf16.mxu0 %v923
    %1239 = vmatpush1.bf16.msra.mxu0 %v922
    %1240 = vmatprep.subr.bf16.mxu0 %v927
    %1241 = vmatpush1.bf16.msra.mxu0 %v926
    %1242 = vmatprep.subr.bf16.mxu0 %v931
    %1243 = vmatpush1.bf16.msra.mxu0 %v930
    %1244 = vmatprep.subr.bf16.mxu0 %v935
    %1245 = vmatpush1.bf16.msra.mxu0 %v934
    %1246 = vmatprep.subr.bf16.mxu0 %v939
    %1247 = vmatpush1.bf16.msra.mxu0 %v938
    %1248 = vmatprep.subr.bf16.mxu0 %v943
    %1249 = vmatpush1.bf16.msra.mxu0 %v942
    %1250 = vmatprep.mubr.bf16.mxu0 %v489
    %1251 = vmatmul.mubr.bf16.gmra.mrb[0].mxu0 %v488
    %v1252 = vpop.f32.mrb[0].mxu0
    %v1253 = vadd.f32 0.0, %v1252
    %v1254 = vpop.f32.mrb[0].mxu0
    %v1255 = vadd.f32 0.0, %v1254
    %v1256 = vpop.f32.mrb[0].mxu0
    %v1257 = vpop.f32.mrb[0].mxu0
    %1258 = vdwg.mxu0
    %1259 = vmatprep.subr.bf16.mxu0 %v947
    %1260 = vmatpush1.bf16.msra.mxu0 %v946
    %1261 = vmatprep.subr.bf16.mxu0 %v951
    %1262 = vmatpush1.bf16.msra.mxu0 %v950
    %1263 = vmatprep.subr.bf16.mxu0 %v955
    %1264 = vmatpush1.bf16.msra.mxu0 %v954
    %1265 = vmatprep.subr.bf16.mxu0 %v959
    %1266 = vmatpush1.bf16.msra.mxu0 %v958
    %1267 = vmatprep.subr.bf16.mxu0 %v963
    %1268 = vmatpush1.bf16.msra.mxu0 %v962
    %1269 = vmatprep.subr.bf16.mxu0 %v967
    %1270 = vmatpush1.bf16.msra.mxu0 %v966
    %1271 = vmatprep.subr.bf16.mxu0 %v971
    %1272 = vmatpush1.bf16.msra.mxu0 %v970
    %1273 = vmatprep.subr.bf16.mxu0 %v975
    %1274 = vmatpush1.bf16.msra.mxu0 %v974
    %1275 = vmatprep.subr.bf16.mxu0 %v979
    %1276 = vmatpush1.bf16.msra.mxu0 %v978
    %1277 = vmatprep.subr.bf16.mxu0 %v983
    %1278 = vmatpush1.bf16.msra.mxu0 %v982
    %1279 = vmatprep.subr.bf16.mxu0 %v987
    %1280 = vmatpush1.bf16.msra.mxu0 %v986
    %1281 = vmatprep.subr.bf16.mxu0 %v991
    %1282 = vmatpush1.bf16.msra.mxu0 %v990
    %1283 = vmatprep.subr.bf16.mxu0 %v995
    %1284 = vmatpush1.bf16.msra.mxu0 %v994
    %1285 = vmatprep.subr.bf16.mxu0 %v999
    %1286 = vmatpush1.bf16.msra.mxu0 %v998
    %1287 = vmatprep.subr.bf16.mxu0 %v1003
    %1288 = vmatpush1.bf16.msra.mxu0 %v1002
    %1289 = vmatprep.subr.bf16.mxu0 %v1007
    %1290 = vmatpush1.bf16.msra.mxu0 %v1006
    %1291 = vmatprep.mubr.bf16.mxu0 %v491
    %1292 = vmatmul.mubr.bf16.gmra.mrb[0].mxu0 %v490
    %v1293 = vpop.f32.mrb[0].mxu0
    %v1294 = vadd.f32 %v1253, %v1293
    %v1295 = vpop.f32.mrb[0].mxu0
    %v1296 = vadd.f32 %v1255, %v1295
    %v1297 = vpop.f32.mrb[0].mxu0
    %v1298 = vpop.f32.mrb[0].mxu0
    %1299 = vdwg.mxu0
    %v1300 = vmax.f32 %v1212, 0.0
    %v1301 = vmax.f32 %v1214, 0.0
    %v1302 = vmax.f32 %v1294, 0.0
    %v1303 = vmax.f32 %v1296, 0.0
    %v1304 = vpack.c.bf16 %v1300, %v1300
    %v1305 = vpack.c.bf16 %v1301, %v1301
    %v1306 = vpack.c.bf16 %v1302, %v1302
    %v1307 = vpack.c.bf16 %v1303, %v1303
    %1308 = vmatprep.subr.bf16.mxu0 %v881
    %1309 = vmatpush1.bf16.msra.mxu0 %v880
    %1310 = vmatprep.subr.bf16.mxu0 %v885
    %1311 = vmatpush1.bf16.msra.mxu0 %v884
    %1312 = vmatprep.subr.bf16.mxu0 %v889
    %1313 = vmatpush1.bf16.msra.mxu0 %v888
    %1314 = vmatprep.subr.bf16.mxu0 %v893
    %1315 = vmatpush1.bf16.msra.mxu0 %v892
    %1316 = vmatprep.subr.bf16.mxu0 %v897
    %1317 = vmatpush1.bf16.msra.mxu0 %v896
    %1318 = vmatprep.subr.bf16.mxu0 %v901
    %1319 = vmatpush1.bf16.msra.mxu0 %v900
    %1320 = vmatprep.subr.bf16.mxu0 %v905
    %1321 = vmatpush1.bf16.msra.mxu0 %v904
    %1322 = vmatprep.subr.bf16.mxu0 %v909
    %1323 = vmatpush1.bf16.msra.mxu0 %v908
    %1324 = vmatprep.subr.bf16.mxu0 %v913
    %1325 = vmatpush1.bf16.msra.mxu0 %v912
    %1326 = vmatprep.subr.bf16.mxu0 %v917
    %1327 = vmatpush1.bf16.msra.mxu0 %v916
    %1328 = vmatprep.subr.bf16.mxu0 %v921
    %1329 = vmatpush1.bf16.msra.mxu0 %v920
    %1330 = vmatprep.subr.bf16.mxu0 %v925
    %1331 = vmatpush1.bf16.msra.mxu0 %v924
    %1332 = vmatprep.subr.bf16.mxu0 %v929
    %1333 = vmatpush1.bf16.msra.mxu0 %v928
    %1334 = vmatprep.subr.bf16.mxu0 %v933
    %1335 = vmatpush1.bf16.msra.mxu0 %v932
    %1336 = vmatprep.subr.bf16.mxu0 %v937
    %1337 = vmatpush1.bf16.msra.mxu0 %v936
    %1338 = vmatprep.subr.bf16.mxu0 %v941
    %1339 = vmatpush1.bf16.msra.mxu0 %v940
    %1340 = vmatprep.mubr.bf16.mxu0 %v1305
    %1341 = vmatmul.mubr.bf16.gmra.mrb[0].mxu0 %v1304
    %v1342 = vpop.f32.mrb[0].mxu0
    %v1343 = vadd.f32 0.0, %v1342
    %v1344 = vpop.f32.mrb[0].mxu0
    %v1345 = vadd.f32 0.0, %v1344
    %v1346 = vpop.f32.mrb[0].mxu0
    %v1347 = vpop.f32.mrb[0].mxu0
    %1348 = vdwg.mxu0
    %1349 = vmatprep.subr.bf16.mxu0 %v945
    %1350 = vmatpush1.bf16.msra.mxu0 %v944
    %1351 = vmatprep.subr.bf16.mxu0 %v949
    %1352 = vmatpush1.bf16.msra.mxu0 %v948
    %1353 = vmatprep.subr.bf16.mxu0 %v953
    %1354 = vmatpush1.bf16.msra.mxu0 %v952
    %1355 = vmatprep.subr.bf16.mxu0 %v957
    %1356 = vmatpush1.bf16.msra.mxu0 %v956
    %1357 = vmatprep.subr.bf16.mxu0 %v961
    %1358 = vmatpush1.bf16.msra.mxu0 %v960
    %1359 = vmatprep.subr.bf16.mxu0 %v965
    %1360 = vmatpush1.bf16.msra.mxu0 %v964
    %1361 = vmatprep.subr.bf16.mxu0 %v969
    %1362 = vmatpush1.bf16.msra.mxu0 %v968
    %1363 = vmatprep.subr.bf16.mxu0 %v973
    %1364 = vmatpush1.bf16.msra.mxu0 %v972
    %1365 = vmatprep.subr.bf16.mxu0 %v977
    %1366 = vmatpush1.bf16.msra.mxu0 %v976
    %1367 = vmatprep.subr.bf16.mxu0 %v981
    %1368 = vmatpush1.bf16.msra.mxu0 %v980
    %1369 = vmatprep.subr.bf16.mxu0 %v985
    %1370 = vmatpush1.bf16.msra.mxu0 %v984
    %1371 = vmatprep.subr.bf16.mxu0 %v989
    %1372 = vmatpush1.bf16.msra.mxu0 %v988
    %1373 = vmatprep.subr.bf16.mxu0 %v993
    %1374 = vmatpush1.bf16.msra.mxu0 %v992
    %1375 = vmatprep.subr.bf16.mxu0 %v997
    %1376 = vmatpush1.bf16.msra.mxu0 %v996
    %1377 = vmatprep.subr.bf16.mxu0 %v1001
    %1378 = vmatpush1.bf16.msra.mxu0 %v1000
    %1379 = vmatprep.subr.bf16.mxu0 %v1005
    %1380 = vmatpush1.bf16.msra.mxu0 %v1004
    %1381 = vmatprep.mubr.bf16.mxu0 %v1307
    %1382 = vmatmul.mubr.bf16.gmra.mrb[0].mxu0 %v1306
    %v1383 = vpop.f32.mrb[0].mxu0
    %v1384 = vadd.f32 %v1343, %v1383
    %v1385 = vpop.f32.mrb[0].mxu0
    %v1386 = vadd.f32 %v1345, %v1385
    %v1387 = vpop.f32.mrb[0].mxu0
    %v1388 = vpop.f32.mrb[0].mxu0
    %1389 = vdwg.mxu0
    %1390 = vmatprep.subr.bf16.mxu0 %v883
    %1391 = vmatpush1.bf16.msra.mxu0 %v882
    %1392 = vmatprep.subr.bf16.mxu0 %v887
    %1393 = vmatpush1.bf16.msra.mxu0 %v886
    %1394 = vmatprep.subr.bf16.mxu0 %v891
    %1395 = vmatpush1.bf16.msra.mxu0 %v890
    %1396 = vmatprep.subr.bf16.mxu0 %v895
    %1397 = vmatpush1.bf16.msra.mxu0 %v894
    %1398 = vmatprep.subr.bf16.mxu0 %v899
    %1399 = vmatpush1.bf16.msra.mxu0 %v898
    %1400 = vmatprep.subr.bf16.mxu0 %v903
    %1401 = vmatpush1.bf16.msra.mxu0 %v902
    %1402 = vmatprep.subr.bf16.mxu0 %v907
    %1403 = vmatpush1.bf16.msra.mxu0 %v906
    %1404 = vmatprep.subr.bf16.mxu0 %v911
    %1405 = vmatpush1.bf16.msra.mxu0 %v910
    %1406 = vmatprep.subr.bf16.mxu0 %v915
    %1407 = vmatpush1.bf16.msra.mxu0 %v914
    %1408 = vmatprep.subr.bf16.mxu0 %v919
    %1409 = vmatpush1.bf16.msra.mxu0 %v918
    %1410 = vmatprep.subr.bf16.mxu0 %v923
    %1411 = vmatpush1.bf16.msra.mxu0 %v922
    %1412 = vmatprep.subr.bf16.mxu0 %v927
    %1413 = vmatpush1.bf16.msra.mxu0 %v926
    %1414 = vmatprep.subr.bf16.mxu0 %v931
    %1415 = vmatpush1.bf16.msra.mxu0 %v930
    %1416 = vmatprep.subr.bf16.mxu0 %v935
    %1417 = vmatpush1.bf16.msra.mxu0 %v934
    %1418 = vmatprep.subr.bf16.mxu0 %v939
    %1419 = vmatpush1.bf16.msra.mxu0 %v938
    %1420 = vmatprep.subr.bf16.mxu0 %v943
    %1421 = vmatpush1.bf16.msra.mxu0 %v942
    %1422 = vmatprep.mubr.bf16.mxu0 %v1305
    %1423 = vmatmul.mubr.bf16.gmra.mrb[0].mxu0 %v1304
    %v1424 = vpop.f32.mrb[0].mxu0
    %v1425 = vadd.f32 0.0, %v1424
    %v1426 = vpop.f32.mrb[0].mxu0
    %v1427 = vadd.f32 0.0, %v1426
    %v1428 = vpop.f32.mrb[0].mxu0
    %v1429 = vpop.f32.mrb[0].mxu0
    %1430 = vdwg.mxu0
    %1431 = vmatprep.subr.bf16.mxu0 %v947
    %1432 = vmatpush1.bf16.msra.mxu0 %v946
    %1433 = vmatprep.subr.bf16.mxu0 %v951
    %1434 = vmatpush1.bf16.msra.mxu0 %v950
    %1435 = vmatprep.subr.bf16.mxu0 %v955
    %1436 = vmatpush1.bf16.msra.mxu0 %v954
    %1437 = vmatprep.subr.bf16.mxu0 %v959
    %1438 = vmatpush1.bf16.msra.mxu0 %v958
    %1439 = vmatprep.subr.bf16.mxu0 %v963
    %1440 = vmatpush1.bf16.msra.mxu0 %v962
    %1441 = vmatprep.subr.bf16.mxu0 %v967
    %1442 = vmatpush1.bf16.msra.mxu0 %v966
    %1443 = vmatprep.subr.bf16.mxu0 %v971
    %1444 = vmatpush1.bf16.msra.mxu0 %v970
    %1445 = vmatprep.subr.bf16.mxu0 %v975
    %1446 = vmatpush1.bf16.msra.mxu0 %v974
    %1447 = vmatprep.subr.bf16.mxu0 %v979
    %1448 = vmatpush1.bf16.msra.mxu0 %v978
    %1449 = vmatprep.subr.bf16.mxu0 %v983
    %1450 = vmatpush1.bf16.msra.mxu0 %v982
    %1451 = vmatprep.subr.bf16.mxu0 %v987
    %1452 = vmatpush1.bf16.msra.mxu0 %v986
    %1453 = vmatprep.subr.bf16.mxu0 %v991
    %1454 = vmatpush1.bf16.msra.mxu0 %v990
    %1455 = vmatprep.subr.bf16.mxu0 %v995
    %1456 = vmatpush1.bf16.msra.mxu0 %v994
    %1457 = vmatprep.subr.bf16.mxu0 %v999
    %1458 = vmatpush1.bf16.msra.mxu0 %v998
    %1459 = vmatprep.subr.bf16.mxu0 %v1003
    %1460 = vmatpush1.bf16.msra.mxu0 %v1002
    %1461 = vmatprep.subr.bf16.mxu0 %v1007
    %1462 = vmatpush1.bf16.msra.mxu0 %v1006
    %1463 = vmatprep.mubr.bf16.mxu0 %v1307
    %1464 = vmatmul.mubr.bf16.gmra.mrb[0].mxu0 %v1306
    %v1465 = vpop.f32.mrb[0].mxu0
    %v1466 = vadd.f32 %v1425, %v1465
    %v1467 = vpop.f32.mrb[0].mxu0
    %v1468 = vadd.f32 %v1427, %v1467
    %v1469 = vpop.f32.mrb[0].mxu0
    %v1470 = vpop.f32.mrb[0].mxu0
    %1471 = vdwg.mxu0
    %v1472 = vpack.c.bf16 %v1384, %v1384
    %v1473 = vpack.c.bf16 %v1386, %v1386
    %v1474 = vpack.c.bf16 %v1466, %v1466
    %v1475 = vpack.c.bf16 %v1468, %v1468
    %v1604 = vunpack.c.l.b16 %v332
    %v1605 = vunpack.c.h.b16 %v332
    %v1606 = vunpack.c.l.b16 %v333
    %v1607 = vunpack.c.h.b16 %v333
    %v1608 = vunpack.c.l.b16 %v334
    %v1609 = vunpack.c.h.b16 %v334
    %v1610 = vunpack.c.l.b16 %v335
    %v1611 = vunpack.c.h.b16 %v335
    %v1612 = vunpack.c.l.b16 %v336
    %v1613 = vunpack.c.h.b16 %v336
    %v1614 = vunpack.c.l.b16 %v337
    %v1615 = vunpack.c.h.b16 %v337
    %v1616 = vunpack.c.l.b16 %v338
    %v1617 = vunpack.c.h.b16 %v338
    %v1618 = vunpack.c.l.b16 %v339
    %v1619 = vunpack.c.h.b16 %v339
    %v1620 = vunpack.c.l.b16 %v340
    %v1621 = vunpack.c.h.b16 %v340
    %v1622 = vunpack.c.l.b16 %v341
    %v1623 = vunpack.c.h.b16 %v341
    %v1624 = vunpack.c.l.b16 %v342
    %v1625 = vunpack.c.h.b16 %v342
    %v1626 = vunpack.c.l.b16 %v343
    %v1627 = vunpack.c.h.b16 %v343
    %v1628 = vunpack.c.l.b16 %v344
    %v1629 = vunpack.c.h.b16 %v344
    %v1630 = vunpack.c.l.b16 %v345
    %v1631 = vunpack.c.h.b16 %v345
    %v1632 = vunpack.c.l.b16 %v346
    %v1633 = vunpack.c.h.b16 %v346
    %v1634 = vunpack.c.l.b16 %v347
    %v1635 = vunpack.c.h.b16 %v347
    %v1636 = vunpack.c.l.b16 %v348
    %v1637 = vunpack.c.h.b16 %v348
    %v1638 = vunpack.c.l.b16 %v349
    %v1639 = vunpack.c.h.b16 %v349
    %v1640 = vunpack.c.l.b16 %v350
    %v1641 = vunpack.c.h.b16 %v350
    %v1642 = vunpack.c.l.b16 %v351
    %v1643 = vunpack.c.h.b16 %v351
    %v1644 = vunpack.c.l.b16 %v352
    %v1645 = vunpack.c.h.b16 %v352
    %v1646 = vunpack.c.l.b16 %v353
    %v1647 = vunpack.c.h.b16 %v353
    %v1648 = vunpack.c.l.b16 %v354
    %v1649 = vunpack.c.h.b16 %v354
    %v1650 = vunpack.c.l.b16 %v355
    %v1651 = vunpack.c.h.b16 %v355
    %v1652 = vunpack.c.l.b16 %v356
    %v1653 = vunpack.c.h.b16 %v356
    %v1654 = vunpack.c.l.b16 %v357
    %v1655 = vunpack.c.h.b16 %v357
    %v1656 = vunpack.c.l.b16 %v358
    %v1657 = vunpack.c.h.b16 %v358
    %v1658 = vunpack.c.l.b16 %v359
    %v1659 = vunpack.c.h.b16 %v359
    %v1660 = vunpack.c.l.b16 %v360
    %v1661 = vunpack.c.h.b16 %v360
    %v1662 = vunpack.c.l.b16 %v361
    %v1663 = vunpack.c.h.b16 %v361
    %v1664 = vunpack.c.l.b16 %v362
    %v1665 = vunpack.c.h.b16 %v362
    %v1666 = vunpack.c.l.b16 %v363
    %v1667 = vunpack.c.h.b16 %v363
    %v1668 = vunpack.c.l.b16 %v364
    %v1669 = vunpack.c.h.b16 %v364
    %v1670 = vunpack.c.l.b16 %v365
    %v1671 = vunpack.c.h.b16 %v365
    %v1672 = vunpack.c.l.b16 %v366
    %v1673 = vunpack.c.h.b16 %v366
    %v1674 = vunpack.c.l.b16 %v367
    %v1675 = vunpack.c.h.b16 %v367
    %v1676 = vunpack.c.l.b16 %v368
    %v1677 = vunpack.c.h.b16 %v368
    %v1678 = vunpack.c.l.b16 %v369
    %v1679 = vunpack.c.h.b16 %v369
    %v1680 = vunpack.c.l.b16 %v370
    %v1681 = vunpack.c.h.b16 %v370
    %v1682 = vunpack.c.l.b16 %v371
    %v1683 = vunpack.c.h.b16 %v371
    %v1684 = vunpack.c.l.b16 %v372
    %v1685 = vunpack.c.h.b16 %v372
    %v1686 = vunpack.c.l.b16 %v373
    %v1687 = vunpack.c.h.b16 %v373
    %v1688 = vunpack.c.l.b16 %v374
    %v1689 = vunpack.c.h.b16 %v374
    %v1690 = vunpack.c.l.b16 %v375
    %v1691 = vunpack.c.h.b16 %v375
    %v1692 = vunpack.c.l.b16 %v376
    %v1693 = vunpack.c.h.b16 %v376
    %v1694 = vunpack.c.l.b16 %v377
    %v1695 = vunpack.c.h.b16 %v377
    %v1696 = vunpack.c.l.b16 %v378
    %v1697 = vunpack.c.h.b16 %v378
    %v1698 = vunpack.c.l.b16 %v379
    %v1699 = vunpack.c.h.b16 %v379
    %v1700 = vunpack.c.l.b16 %v380
    %v1701 = vunpack.c.h.b16 %v380
    %v1702 = vunpack.c.l.b16 %v381
    %v1703 = vunpack.c.h.b16 %v381
    %v1704 = vunpack.c.l.b16 %v382
    %v1705 = vunpack.c.h.b16 %v382
    %v1706 = vunpack.c.l.b16 %v383
    %v1707 = vunpack.c.h.b16 %v383
    %v1708 = vunpack.c.l.b16 %v384
    %v1709 = vunpack.c.h.b16 %v384
    %v1710 = vunpack.c.l.b16 %v385
    %v1711 = vunpack.c.h.b16 %v385
    %v1712 = vunpack.c.l.b16 %v386
    %v1713 = vunpack.c.h.b16 %v386
    %v1714 = vunpack.c.l.b16 %v387
    %v1715 = vunpack.c.h.b16 %v387
    %v1716 = vunpack.c.l.b16 %v388
    %v1717 = vunpack.c.h.b16 %v388
    %v1718 = vunpack.c.l.b16 %v389
    %v1719 = vunpack.c.h.b16 %v389
    %v1720 = vunpack.c.l.b16 %v390
    %v1721 = vunpack.c.h.b16 %v390
    %v1722 = vunpack.c.l.b16 %v391
    %v1723 = vunpack.c.h.b16 %v391
    %v1724 = vunpack.c.l.b16 %v392
    %v1725 = vunpack.c.h.b16 %v392
    %v1726 = vunpack.c.l.b16 %v393
    %v1727 = vunpack.c.h.b16 %v393
    %v1728 = vunpack.c.l.b16 %v394
    %v1729 = vunpack.c.h.b16 %v394
    %v1730 = vunpack.c.l.b16 %v395
    %v1731 = vunpack.c.h.b16 %v395
    %v1732 = vunpack.c.l.b16 %v396
    %v1733 = vunpack.c.h.b16 %v396
    %v1734 = vunpack.c.l.b16 %v397
    %v1735 = vunpack.c.h.b16 %v397
    %v1736 = vunpack.c.l.b16 %v398
    %v1737 = vunpack.c.h.b16 %v398
    %v1738 = vunpack.c.l.b16 %v399
    %v1739 = vunpack.c.h.b16 %v399
    %v1740 = vunpack.c.l.b16 %v400
    %v1741 = vunpack.c.h.b16 %v400
    %v1742 = vunpack.c.l.b16 %v401
    %v1743 = vunpack.c.h.b16 %v401
    %v1744 = vunpack.c.l.b16 %v402
    %v1745 = vunpack.c.h.b16 %v402
    %v1746 = vunpack.c.l.b16 %v403
    %v1747 = vunpack.c.h.b16 %v403
    %v1748 = vunpack.c.l.b16 %v404
    %v1749 = vunpack.c.h.b16 %v404
    %v1750 = vunpack.c.l.b16 %v405
    %v1751 = vunpack.c.h.b16 %v405
    %v1752 = vunpack.c.l.b16 %v406
    %v1753 = vunpack.c.h.b16 %v406
    %v1754 = vunpack.c.l.b16 %v407
    %v1755 = vunpack.c.h.b16 %v407
    %v1756 = vunpack.c.l.b16 %v408
    %v1757 = vunpack.c.h.b16 %v408
    %v1758 = vunpack.c.l.b16 %v409
    %v1759 = vunpack.c.h.b16 %v409
    %v1760 = vunpack.c.l.b16 %v410
    %v1761 = vunpack.c.h.b16 %v410
    %v1762 = vunpack.c.l.b16 %v411
    %v1763 = vunpack.c.h.b16 %v411
    %v1764 = vunpack.c.l.b16 %v412
    %v1765 = vunpack.c.h.b16 %v412
    %v1766 = vunpack.c.l.b16 %v413
    %v1767 = vunpack.c.h.b16 %v413
    %v1768 = vunpack.c.l.b16 %v414
    %v1769 = vunpack.c.h.b16 %v414
    %v1770 = vunpack.c.l.b16 %v415
    %v1771 = vunpack.c.h.b16 %v415
    %v1772 = vunpack.c.l.b16 %v416
    %v1773 = vunpack.c.h.b16 %v416
    %v1774 = vunpack.c.l.b16 %v417
    %v1775 = vunpack.c.h.b16 %v417
    %v1776 = vunpack.c.l.b16 %v418
    %v1777 = vunpack.c.h.b16 %v418
    %v1778 = vunpack.c.l.b16 %v419
    %v1779 = vunpack.c.h.b16 %v419
    %v1780 = vunpack.c.l.b16 %v420
    %v1781 = vunpack.c.h.b16 %v420
    %v1782 = vunpack.c.l.b16 %v421
    %v1783 = vunpack.c.h.b16 %v421
    %v1784 = vunpack.c.l.b16 %v422
    %v1785 = vunpack.c.h.b16 %v422
    %v1786 = vunpack.c.l.b16 %v423
    %v1787 = vunpack.c.h.b16 %v423
    %v1788 = vunpack.c.l.b16 %v424
    %v1789 = vunpack.c.h.b16 %v424
    %v1790 = vunpack.c.l.b16 %v425
    %v1791 = vunpack.c.h.b16 %v425
    %v1792 = vunpack.c.l.b16 %v426
    %v1793 = vunpack.c.h.b16 %v426
    %v1794 = vunpack.c.l.b16 %v427
    %v1795 = vunpack.c.h.b16 %v427
    %v1796 = vunpack.c.l.b16 %v428
    %v1797 = vunpack.c.h.b16 %v428
    %v1798 = vunpack.c.l.b16 %v429
    %v1799 = vunpack.c.h.b16 %v429
    %v1800 = vunpack.c.l.b16 %v430
    %v1801 = vunpack.c.h.b16 %v430
    %v1802 = vunpack.c.l.b16 %v431
    %v1803 = vunpack.c.h.b16 %v431
    %v1804 = vunpack.c.l.b16 %v432
    %v1805 = vunpack.c.h.b16 %v432
    %v1806 = vunpack.c.l.b16 %v433
    %v1807 = vunpack.c.h.b16 %v433
    %v1808 = vunpack.c.l.b16 %v434
    %v1809 = vunpack.c.h.b16 %v434
    %v1810 = vunpack.c.l.b16 %v435
    %v1811 = vunpack.c.h.b16 %v435
    %v1812 = vunpack.c.l.b16 %v436
    %v1813 = vunpack.c.h.b16 %v436
    %v1814 = vunpack.c.l.b16 %v437
    %v1815 = vunpack.c.h.b16 %v437
    %v1816 = vunpack.c.l.b16 %v438
    %v1817 = vunpack.c.h.b16 %v438
    %v1818 = vunpack.c.l.b16 %v439
    %v1819 = vunpack.c.h.b16 %v439
    %v1820 = vunpack.c.l.b16 %v440
    %v1821 = vunpack.c.h.b16 %v440
    %v1822 = vunpack.c.l.b16 %v441
    %v1823 = vunpack.c.h.b16 %v441
    %v1824 = vunpack.c.l.b16 %v442
    %v1825 = vunpack.c.h.b16 %v442
    %v1826 = vunpack.c.l.b16 %v443
    %v1827 = vunpack.c.h.b16 %v443
    %v1828 = vunpack.c.l.b16 %v444
    %v1829 = vunpack.c.h.b16 %v444
    %v1830 = vunpack.c.l.b16 %v445
    %v1831 = vunpack.c.h.b16 %v445
    %v1832 = vunpack.c.l.b16 %v446
    %v1833 = vunpack.c.h.b16 %v446
    %v1834 = vunpack.c.l.b16 %v447
    %v1835 = vunpack.c.h.b16 %v447
    %v1836 = vunpack.c.l.b16 %v448
    %v1837 = vunpack.c.h.b16 %v448
    %v1838 = vunpack.c.l.b16 %v449
    %v1839 = vunpack.c.h.b16 %v449
    %v1840 = vunpack.c.l.b16 %v450
    %v1841 = vunpack.c.h.b16 %v450
    %v1842 = vunpack.c.l.b16 %v451
    %v1843 = vunpack.c.h.b16 %v451
    %v1844 = vunpack.c.l.b16 %v452
    %v1845 = vunpack.c.h.b16 %v452
    %v1846 = vunpack.c.l.b16 %v453
    %v1847 = vunpack.c.h.b16 %v453
    %v1848 = vunpack.c.l.b16 %v454
    %v1849 = vunpack.c.h.b16 %v454
    %v1850 = vunpack.c.l.b16 %v455
    %v1851 = vunpack.c.h.b16 %v455
    %v1852 = vunpack.c.l.b16 %v456
    %v1853 = vunpack.c.h.b16 %v456
    %v1854 = vunpack.c.l.b16 %v457
    %v1855 = vunpack.c.h.b16 %v457
    %v1856 = vunpack.c.l.b16 %v458
    %v1857 = vunpack.c.h.b16 %v458
    %v1858 = vunpack.c.l.b16 %v459
    %v1859 = vunpack.c.h.b16 %v459
    %v1860 = vpack.c.b16 %v1608, %v1604
    %v1861 = vpack.c.b16 %v1609, %v1605
    %v1862 = vpack.c.b16 %v1610, %v1606
    %v1863 = vpack.c.b16 %v1611, %v1607
    %v1864 = vpack.c.b16 %v1616, %v1612
    %v1865 = vpack.c.b16 %v1617, %v1613
    %v1866 = vpack.c.b16 %v1618, %v1614
    %v1867 = vpack.c.b16 %v1619, %v1615
    %v1868 = vpack.c.b16 %v1624, %v1620
    %v1869 = vpack.c.b16 %v1625, %v1621
    %v1870 = vpack.c.b16 %v1626, %v1622
    %v1871 = vpack.c.b16 %v1627, %v1623
    %v1872 = vpack.c.b16 %v1632, %v1628
    %v1873 = vpack.c.b16 %v1633, %v1629
    %v1874 = vpack.c.b16 %v1634, %v1630
    %v1875 = vpack.c.b16 %v1635, %v1631
    %v1876 = vpack.c.b16 %v1640, %v1636
    %v1877 = vpack.c.b16 %v1641, %v1637
    %v1878 = vpack.c.b16 %v1642, %v1638
    %v1879 = vpack.c.b16 %v1643, %v1639
    %v1880 = vpack.c.b16 %v1648, %v1644
    %v1881 = vpack.c.b16 %v1649, %v1645
    %v1882 = vpack.c.b16 %v1650, %v1646
    %v1883 = vpack.c.b16 %v1651, %v1647
    %v1884 = vpack.c.b16 %v1656, %v1652
    %v1885 = vpack.c.b16 %v1657, %v1653
    %v1886 = vpack.c.b16 %v1658, %v1654
    %v1887 = vpack.c.b16 %v1659, %v1655
    %v1888 = vpack.c.b16 %v1664, %v1660
    %v1889 = vpack.c.b16 %v1665, %v1661
    %v1890 = vpack.c.b16 %v1666, %v1662
    %v1891 = vpack.c.b16 %v1667, %v1663
    %v1892 = vpack.c.b16 %v1672, %v1668
    %v1893 = vpack.c.b16 %v1673, %v1669
    %v1894 = vpack.c.b16 %v1674, %v1670
    %v1895 = vpack.c.b16 %v1675, %v1671
    %v1896 = vpack.c.b16 %v1680, %v1676
    %v1897 = vpack.c.b16 %v1681, %v1677
    %v1898 = vpack.c.b16 %v1682, %v1678
    %v1899 = vpack.c.b16 %v1683, %v1679
    %v1900 = vpack.c.b16 %v1688, %v1684
    %v1901 = vpack.c.b16 %v1689, %v1685
    %v1902 = vpack.c.b16 %v1690, %v1686
    %v1903 = vpack.c.b16 %v1691, %v1687
    %v1904 = vpack.c.b16 %v1696, %v1692
    %v1905 = vpack.c.b16 %v1697, %v1693
    %v1906 = vpack.c.b16 %v1698, %v1694
    %v1907 = vpack.c.b16 %v1699, %v1695
    %v1908 = vpack.c.b16 %v1704, %v1700
    %v1909 = vpack.c.b16 %v1705, %v1701
    %v1910 = vpack.c.b16 %v1706, %v1702
    %v1911 = vpack.c.b16 %v1707, %v1703
    %v1912 = vpack.c.b16 %v1712, %v1708
    %v1913 = vpack.c.b16 %v1713, %v1709
    %v1914 = vpack.c.b16 %v1714, %v1710
    %v1915 = vpack.c.b16 %v1715, %v1711
    %v1916 = vpack.c.b16 %v1720, %v1716
    %v1917 = vpack.c.b16 %v1721, %v1717
    %v1918 = vpack.c.b16 %v1722, %v1718
    %v1919 = vpack.c.b16 %v1723, %v1719
    %v1920 = vpack.c.b16 %v1728, %v1724
    %v1921 = vpack.c.b16 %v1729, %v1725
    %v1922 = vpack.c.b16 %v1730, %v1726
    %v1923 = vpack.c.b16 %v1731, %v1727
    %v1924 = vpack.c.b16 %v1736, %v1732
    %v1925 = vpack.c.b16 %v1737, %v1733
    %v1926 = vpack.c.b16 %v1738, %v1734
    %v1927 = vpack.c.b16 %v1739, %v1735
    %v1928 = vpack.c.b16 %v1744, %v1740
    %v1929 = vpack.c.b16 %v1745, %v1741
    %v1930 = vpack.c.b16 %v1746, %v1742
    %v1931 = vpack.c.b16 %v1747, %v1743
    %v1932 = vpack.c.b16 %v1752, %v1748
    %v1933 = vpack.c.b16 %v1753, %v1749
    %v1934 = vpack.c.b16 %v1754, %v1750
    %v1935 = vpack.c.b16 %v1755, %v1751
    %v1936 = vpack.c.b16 %v1760, %v1756
    %v1937 = vpack.c.b16 %v1761, %v1757
    %v1938 = vpack.c.b16 %v1762, %v1758
    %v1939 = vpack.c.b16 %v1763, %v1759
    %v1940 = vpack.c.b16 %v1768, %v1764
    %v1941 = vpack.c.b16 %v1769, %v1765
    %v1942 = vpack.c.b16 %v1770, %v1766
    %v1943 = vpack.c.b16 %v1771, %v1767
    %v1944 = vpack.c.b16 %v1776, %v1772
    %v1945 = vpack.c.b16 %v1777, %v1773
    %v1946 = vpack.c.b16 %v1778, %v1774
    %v1947 = vpack.c.b16 %v1779, %v1775
    %v1948 = vpack.c.b16 %v1784, %v1780
    %v1949 = vpack.c.b16 %v1785, %v1781
    %v1950 = vpack.c.b16 %v1786, %v1782
    %v1951 = vpack.c.b16 %v1787, %v1783
    %v1952 = vpack.c.b16 %v1792, %v1788
    %v1953 = vpack.c.b16 %v1793, %v1789
    %v1954 = vpack.c.b16 %v1794, %v1790
    %v1955 = vpack.c.b16 %v1795, %v1791
    %v1956 = vpack.c.b16 %v1800, %v1796
    %v1957 = vpack.c.b16 %v1801, %v1797
    %v1958 = vpack.c.b16 %v1802, %v1798
    %v1959 = vpack.c.b16 %v1803, %v1799
    %v1960 = vpack.c.b16 %v1808, %v1804
    %v1961 = vpack.c.b16 %v1809, %v1805
    %v1962 = vpack.c.b16 %v1810, %v1806
    %v1963 = vpack.c.b16 %v1811, %v1807
    %v1964 = vpack.c.b16 %v1816, %v1812
    %v1965 = vpack.c.b16 %v1817, %v1813
    %v1966 = vpack.c.b16 %v1818, %v1814
    %v1967 = vpack.c.b16 %v1819, %v1815
    %v1968 = vpack.c.b16 %v1824, %v1820
    %v1969 = vpack.c.b16 %v1825, %v1821
    %v1970 = vpack.c.b16 %v1826, %v1822
    %v1971 = vpack.c.b16 %v1827, %v1823
    %v1972 = vpack.c.b16 %v1832, %v1828
    %v1973 = vpack.c.b16 %v1833, %v1829
    %v1974 = vpack.c.b16 %v1834, %v1830
    %v1975 = vpack.c.b16 %v1835, %v1831
    %v1976 = vpack.c.b16 %v1840, %v1836
    %v1977 = vpack.c.b16 %v1841, %v1837
    %v1978 = vpack.c.b16 %v1842, %v1838
    %v1979 = vpack.c.b16 %v1843, %v1839
    %v1980 = vpack.c.b16 %v1848, %v1844
    %v1981 = vpack.c.b16 %v1849, %v1845
    %v1982 = vpack.c.b16 %v1850, %v1846
    %v1983 = vpack.c.b16 %v1851, %v1847
    %v1984 = vpack.c.b16 %v1856, %v1852
    %v1985 = vpack.c.b16 %v1857, %v1853
    %v1986 = vpack.c.b16 %v1858, %v1854
    %v1987 = vpack.c.b16 %v1859, %v1855
    %2116 = vmatprep.subr.bf16.mxu0 %v1861
    %2117 = vmatpush1.bf16.msra.mxu0 %v1860
    %2118 = vmatprep.subr.bf16.mxu0 %v1865
    %2119 = vmatpush1.bf16.msra.mxu0 %v1864
    %2120 = vmatprep.subr.bf16.mxu0 %v1869
    %2121 = vmatpush1.bf16.msra.mxu0 %v1868
    %2122 = vmatprep.subr.bf16.mxu0 %v1873
    %2123 = vmatpush1.bf16.msra.mxu0 %v1872
    %2124 = vmatprep.subr.bf16.mxu0 %v1877
    %2125 = vmatpush1.bf16.msra.mxu0 %v1876
    %2126 = vmatprep.subr.bf16.mxu0 %v1881
    %2127 = vmatpush1.bf16.msra.mxu0 %v1880
    %2128 = vmatprep.subr.bf16.mxu0 %v1885
    %2129 = vmatpush1.bf16.msra.mxu0 %v1884
    %2130 = vmatprep.subr.bf16.mxu0 %v1889
    %2131 = vmatpush1.bf16.msra.mxu0 %v1888
    %2132 = vmatprep.subr.bf16.mxu0 %v1893
    %2133 = vmatpush1.bf16.msra.mxu0 %v1892
    %2134 = vmatprep.subr.bf16.mxu0 %v1897
    %2135 = vmatpush1.bf16.msra.mxu0 %v1896
    %2136 = vmatprep.subr.bf16.mxu0 %v1901
    %2137 = vmatpush1.bf16.msra.mxu0 %v1900
    %2138 = vmatprep.subr.bf16.mxu0 %v1905
    %2139 = vmatpush1.bf16.msra.mxu0 %v1904
    %2140 = vmatprep.subr.bf16.mxu0 %v1909
    %2141 = vmatpush1.bf16.msra.mxu0 %v1908
    %2142 = vmatprep.subr.bf16.mxu0 %v1913
    %2143 = vmatpush1.bf16.msra.mxu0 %v1912
    %2144 = vmatprep.subr.bf16.mxu0 %v1917
    %2145 = vmatpush1.bf16.msra.mxu0 %v1916
    %2146 = vmatprep.subr.bf16.mxu0 %v1921
    %2147 = vmatpush1.bf16.msra.mxu0 %v1920
    %2148 = vmatprep.mubr.bf16.mxu0 %v1473
    %2149 = vmatmul.mubr.bf16.gmra.mrb[0].mxu0 %v1472
    %v2150 = vpop.f32.mrb[0].mxu0
    %v2151 = vadd.f32 %v465, %v2150
    %v2152 = vpop.f32.mrb[0].mxu0
    %v2153 = vadd.f32 %v469, %v2152
    %v2154 = vpop.f32.mrb[0].mxu0
    %v2155 = vpop.f32.mrb[0].mxu0
    %2156 = vdwg.mxu0
    %2157 = vmatprep.subr.bf16.mxu0 %v1925
    %2158 = vmatpush1.bf16.msra.mxu0 %v1924
    %2159 = vmatprep.subr.bf16.mxu0 %v1929
    %2160 = vmatpush1.bf16.msra.mxu0 %v1928
    %2161 = vmatprep.subr.bf16.mxu0 %v1933
    %2162 = vmatpush1.bf16.msra.mxu0 %v1932
    %2163 = vmatprep.subr.bf16.mxu0 %v1937
    %2164 = vmatpush1.bf16.msra.mxu0 %v1936
    %2165 = vmatprep.subr.bf16.mxu0 %v1941
    %2166 = vmatpush1.bf16.msra.mxu0 %v1940
    %2167 = vmatprep.subr.bf16.mxu0 %v1945
    %2168 = vmatpush1.bf16.msra.mxu0 %v1944
    %2169 = vmatprep.subr.bf16.mxu0 %v1949
    %2170 = vmatpush1.bf16.msra.mxu0 %v1948
    %2171 = vmatprep.subr.bf16.mxu0 %v1953
    %2172 = vmatpush1.bf16.msra.mxu0 %v1952
    %2173 = vmatprep.subr.bf16.mxu0 %v1957
    %2174 = vmatpush1.bf16.msra.mxu0 %v1956
    %2175 = vmatprep.subr.bf16.mxu0 %v1961
    %2176 = vmatpush1.bf16.msra.mxu0 %v1960
    %2177 = vmatprep.subr.bf16.mxu0 %v1965
    %2178 = vmatpush1.bf16.msra.mxu0 %v1964
    %2179 = vmatprep.subr.bf16.mxu0 %v1969
    %2180 = vmatpush1.bf16.msra.mxu0 %v1968
    %2181 = vmatprep.subr.bf16.mxu0 %v1973
    %2182 = vmatpush1.bf16.msra.mxu0 %v1972
    %2183 = vmatprep.subr.bf16.mxu0 %v1977
    %2184 = vmatpush1.bf16.msra.mxu0 %v1976
    %2185 = vmatprep.subr.bf16.mxu0 %v1981
    %2186 = vmatpush1.bf16.msra.mxu0 %v1980
    %2187 = vmatprep.subr.bf16.mxu0 %v1985
    %2188 = vmatpush1.bf16.msra.mxu0 %v1984
    %2189 = vmatprep.mubr.bf16.mxu0 %v1475
    %2190 = vmatmul.mubr.bf16.gmra.mrb[0].mxu0 %v1474
    %v2191 = vpop.f32.mrb[0].mxu0
    %v2192 = vadd.f32 %v2151, %v2191
    %v2193 = vpop.f32.mrb[0].mxu0
    %v2194 = vadd.f32 %v2153, %v2193
    %v2195 = vpop.f32.mrb[0].mxu0
    %v2196 = vpop.f32.mrb[0].mxu0
    %2197 = vdwg.mxu0
    %2198 = vmatprep.subr.bf16.mxu0 %v1863
    %2199 = vmatpush1.bf16.msra.mxu0 %v1862
    %2200 = vmatprep.subr.bf16.mxu0 %v1867
    %2201 = vmatpush1.bf16.msra.mxu0 %v1866
    %2202 = vmatprep.subr.bf16.mxu0 %v1871
    %2203 = vmatpush1.bf16.msra.mxu0 %v1870
    %2204 = vmatprep.subr.bf16.mxu0 %v1875
    %2205 = vmatpush1.bf16.msra.mxu0 %v1874
    %2206 = vmatprep.subr.bf16.mxu0 %v1879
    %2207 = vmatpush1.bf16.msra.mxu0 %v1878
    %2208 = vmatprep.subr.bf16.mxu0 %v1883
    %2209 = vmatpush1.bf16.msra.mxu0 %v1882
    %2210 = vmatprep.subr.bf16.mxu0 %v1887
    %2211 = vmatpush1.bf16.msra.mxu0 %v1886
    %2212 = vmatprep.subr.bf16.mxu0 %v1891
    %2213 = vmatpush1.bf16.msra.mxu0 %v1890
    %2214 = vmatprep.subr.bf16.mxu0 %v1895
    %2215 = vmatpush1.bf16.msra.mxu0 %v1894
    %2216 = vmatprep.subr.bf16.mxu0 %v1899
    %2217 = vmatpush1.bf16.msra.mxu0 %v1898
    %2218 = vmatprep.subr.bf16.mxu0 %v1903
    %2219 = vmatpush1.bf16.msra.mxu0 %v1902
    %2220 = vmatprep.subr.bf16.mxu0 %v1907
    %2221 = vmatpush1.bf16.msra.mxu0 %v1906
    %2222 = vmatprep.subr.bf16.mxu0 %v1911
    %2223 = vmatpush1.bf16.msra.mxu0 %v1910
    %2224 = vmatprep.subr.bf16.mxu0 %v1915
    %2225 = vmatpush1.bf16.msra.mxu0 %v1914
    %2226 = vmatprep.subr.bf16.mxu0 %v1919
    %2227 = vmatpush1.bf16.msra.mxu0 %v1918
    %2228 = vmatprep.subr.bf16.mxu0 %v1923
    %2229 = vmatpush1.bf16.msra.mxu0 %v1922
    %2230 = vmatprep.mubr.bf16.mxu0 %v1473
    %2231 = vmatmul.mubr.bf16.gmra.mrb[0].mxu0 %v1472
    %v2232 = vpop.f32.mrb[0].mxu0
    %v2233 = vadd.f32 %v473, %v2232
    %v2234 = vpop.f32.mrb[0].mxu0
    %v2235 = vadd.f32 %v477, %v2234
    %v2236 = vpop.f32.mrb[0].mxu0
    %v2237 = vpop.f32.mrb[0].mxu0
    %2238 = vdwg.mxu0
    %2239 = vmatprep.subr.bf16.mxu0 %v1927
    %2240 = vmatpush1.bf16.msra.mxu0 %v1926
    %2241 = vmatprep.subr.bf16.mxu0 %v1931
    %2242 = vmatpush1.bf16.msra.mxu0 %v1930
    %2243 = vmatprep.subr.bf16.mxu0 %v1935
    %2244 = vmatpush1.bf16.msra.mxu0 %v1934
    %2245 = vmatprep.subr.bf16.mxu0 %v1939
    %2246 = vmatpush1.bf16.msra.mxu0 %v1938
    %2247 = vmatprep.subr.bf16.mxu0 %v1943
    %2248 = vmatpush1.bf16.msra.mxu0 %v1942
    %2249 = vmatprep.subr.bf16.mxu0 %v1947
    %2250 = vmatpush1.bf16.msra.mxu0 %v1946
    %2251 = vmatprep.subr.bf16.mxu0 %v1951
    %2252 = vmatpush1.bf16.msra.mxu0 %v1950
    %2253 = vmatprep.subr.bf16.mxu0 %v1955
    %2254 = vmatpush1.bf16.msra.mxu0 %v1954
    %2255 = vmatprep.subr.bf16.mxu0 %v1959
    %2256 = vmatpush1.bf16.msra.mxu0 %v1958
    %2257 = vmatprep.subr.bf16.mxu0 %v1963
    %2258 = vmatpush1.bf16.msra.mxu0 %v1962
    %2259 = vmatprep.subr.bf16.mxu0 %v1967
    %2260 = vmatpush1.bf16.msra.mxu0 %v1966
    %2261 = vmatprep.subr.bf16.mxu0 %v1971
    %2262 = vmatpush1.bf16.msra.mxu0 %v1970
    %2263 = vmatprep.subr.bf16.mxu0 %v1975
    %2264 = vmatpush1.bf16.msra.mxu0 %v1974
    %2265 = vmatprep.subr.bf16.mxu0 %v1979
    %2266 = vmatpush1.bf16.msra.mxu0 %v1978
    %2267 = vmatprep.subr.bf16.mxu0 %v1983
    %2268 = vmatpush1.bf16.msra.mxu0 %v1982
    %2269 = vmatprep.subr.bf16.mxu0 %v1987
    %2270 = vmatpush1.bf16.msra.mxu0 %v1986
    %2271 = vmatprep.mubr.bf16.mxu0 %v1475
    %2272 = vmatmul.mubr.bf16.gmra.mrb[0].mxu0 %v1474
    %v2273 = vpop.f32.mrb[0].mxu0
    %v2274 = vadd.f32 %v2233, %v2273
    %v2275 = vpop.f32.mrb[0].mxu0
    %v2276 = vadd.f32 %v2235, %v2275
    %v2277 = vpop.f32.mrb[0].mxu0
    %v2278 = vpop.f32.mrb[0].mxu0
    %2279 = vdwg.mxu0
    %v2280 = vmax.f32 %v2192, 0.0
    %v2281 = vmax.f32 %v2194, 0.0
    %v2282 = vmax.f32 %v2274, 0.0
    %v2283 = vmax.f32 %v2276, 0.0
    %v2284 = vpack.c.bf16 %v2280, %v2280
    %v2285 = vpack.c.bf16 %v2281, %v2281
    %v2286 = vpack.c.bf16 %v2282, %v2282
    %v2287 = vpack.c.bf16 %v2283, %v2283
    %v2416 = vunpack.c.l.b16 %v204
    %v2417 = vunpack.c.h.b16 %v204
    %v2418 = vunpack.c.l.b16 %v205
    %v2419 = vunpack.c.h.b16 %v205
    %v2420 = vunpack.c.l.b16 %v206
    %v2421 = vunpack.c.h.b16 %v206
    %v2422 = vunpack.c.l.b16 %v207
    %v2423 = vunpack.c.h.b16 %v207
    %v2424 = vunpack.c.l.b16 %v208
    %v2425 = vunpack.c.h.b16 %v208
    %v2426 = vunpack.c.l.b16 %v209
    %v2427 = vunpack.c.h.b16 %v209
    %v2428 = vunpack.c.l.b16 %v210
    %v2429 = vunpack.c.h.b16 %v210
    %v2430 = vunpack.c.l.b16 %v211
    %v2431 = vunpack.c.h.b16 %v211
    %v2432 = vunpack.c.l.b16 %v212
    %v2433 = vunpack.c.h.b16 %v212
    %v2434 = vunpack.c.l.b16 %v213
    %v2435 = vunpack.c.h.b16 %v213
    %v2436 = vunpack.c.l.b16 %v214
    %v2437 = vunpack.c.h.b16 %v214
    %v2438 = vunpack.c.l.b16 %v215
    %v2439 = vunpack.c.h.b16 %v215
    %v2440 = vunpack.c.l.b16 %v216
    %v2441 = vunpack.c.h.b16 %v216
    %v2442 = vunpack.c.l.b16 %v217
    %v2443 = vunpack.c.h.b16 %v217
    %v2444 = vunpack.c.l.b16 %v218
    %v2445 = vunpack.c.h.b16 %v218
    %v2446 = vunpack.c.l.b16 %v219
    %v2447 = vunpack.c.h.b16 %v219
    %v2448 = vunpack.c.l.b16 %v220
    %v2449 = vunpack.c.h.b16 %v220
    %v2450 = vunpack.c.l.b16 %v221
    %v2451 = vunpack.c.h.b16 %v221
    %v2452 = vunpack.c.l.b16 %v222
    %v2453 = vunpack.c.h.b16 %v222
    %v2454 = vunpack.c.l.b16 %v223
    %v2455 = vunpack.c.h.b16 %v223
    %v2456 = vunpack.c.l.b16 %v224
    %v2457 = vunpack.c.h.b16 %v224
    %v2458 = vunpack.c.l.b16 %v225
    %v2459 = vunpack.c.h.b16 %v225
    %v2460 = vunpack.c.l.b16 %v226
    %v2461 = vunpack.c.h.b16 %v226
    %v2462 = vunpack.c.l.b16 %v227
    %v2463 = vunpack.c.h.b16 %v227
    %v2464 = vunpack.c.l.b16 %v228
    %v2465 = vunpack.c.h.b16 %v228
    %v2466 = vunpack.c.l.b16 %v229
    %v2467 = vunpack.c.h.b16 %v229
    %v2468 = vunpack.c.l.b16 %v230
    %v2469 = vunpack.c.h.b16 %v230
    %v2470 = vunpack.c.l.b16 %v231
    %v2471 = vunpack.c.h.b16 %v231
    %v2472 = vunpack.c.l.b16 %v232
    %v2473 = vunpack.c.h.b16 %v232
    %v2474 = vunpack.c.l.b16 %v233
    %v2475 = vunpack.c.h.b16 %v233
    %v2476 = vunpack.c.l.b16 %v234
    %v2477 = vunpack.c.h.b16 %v234
    %v2478 = vunpack.c.l.b16 %v235
    %v2479 = vunpack.c.h.b16 %v235
    %v2480 = vunpack.c.l.b16 %v236
    %v2481 = vunpack.c.h.b16 %v236
    %v2482 = vunpack.c.l.b16 %v237
    %v2483 = vunpack.c.h.b16 %v237
    %v2484 = vunpack.c.l.b16 %v238
    %v2485 = vunpack.c.h.b16 %v238
    %v2486 = vunpack.c.l.b16 %v239
    %v2487 = vunpack.c.h.b16 %v239
    %v2488 = vunpack.c.l.b16 %v240
    %v2489 = vunpack.c.h.b16 %v240
    %v2490 = vunpack.c.l.b16 %v241
    %v2491 = vunpack.c.h.b16 %v241
    %v2492 = vunpack.c.l.b16 %v242
    %v2493 = vunpack.c.h.b16 %v242
    %v2494 = vunpack.c.l.b16 %v243
    %v2495 = vunpack.c.h.b16 %v243
    %v2496 = vunpack.c.l.b16 %v244
    %v2497 = vunpack.c.h.b16 %v244
    %v2498 = vunpack.c.l.b16 %v245
    %v2499 = vunpack.c.h.b16 %v245
    %v2500 = vunpack.c.l.b16 %v246
    %v2501 = vunpack.c.h.b16 %v246
    %v2502 = vunpack.c.l.b16 %v247
    %v2503 = vunpack.c.h.b16 %v247
    %v2504 = vunpack.c.l.b16 %v248
    %v2505 = vunpack.c.h.b16 %v248
    %v2506 = vunpack.c.l.b16 %v249
    %v2507 = vunpack.c.h.b16 %v249
    %v2508 = vunpack.c.l.b16 %v250
    %v2509 = vunpack.c.h.b16 %v250
    %v2510 = vunpack.c.l.b16 %v251
    %v2511 = vunpack.c.h.b16 %v251
    %v2512 = vunpack.c.l.b16 %v252
    %v2513 = vunpack.c.h.b16 %v252
    %v2514 = vunpack.c.l.b16 %v253
    %v2515 = vunpack.c.h.b16 %v253
    %v2516 = vunpack.c.l.b16 %v254
    %v2517 = vunpack.c.h.b16 %v254
    %v2518 = vunpack.c.l.b16 %v255
    %v2519 = vunpack.c.h.b16 %v255
    %v2520 = vunpack.c.l.b16 %v256
    %v2521 = vunpack.c.h.b16 %v256
    %v2522 = vunpack.c.l.b16 %v257
    %v2523 = vunpack.c.h.b16 %v257
    %v2524 = vunpack.c.l.b16 %v258
    %v2525 = vunpack.c.h.b16 %v258
    %v2526 = vunpack.c.l.b16 %v259
    %v2527 = vunpack.c.h.b16 %v259
    %v2528 = vunpack.c.l.b16 %v260
    %v2529 = vunpack.c.h.b16 %v260
    %v2530 = vunpack.c.l.b16 %v261
    %v2531 = vunpack.c.h.b16 %v261
    %v2532 = vunpack.c.l.b16 %v262
    %v2533 = vunpack.c.h.b16 %v262
    %v2534 = vunpack.c.l.b16 %v263
    %v2535 = vunpack.c.h.b16 %v263
    %v2536 = vunpack.c.l.b16 %v264
    %v2537 = vunpack.c.h.b16 %v264
    %v2538 = vunpack.c.l.b16 %v265
    %v2539 = vunpack.c.h.b16 %v265
    %v2540 = vunpack.c.l.b16 %v266
    %v2541 = vunpack.c.h.b16 %v266
    %v2542 = vunpack.c.l.b16 %v267
    %v2543 = vunpack.c.h.b16 %v267
    %v2544 = vunpack.c.l.b16 %v268
    %v2545 = vunpack.c.h.b16 %v268
    %v2546 = vunpack.c.l.b16 %v269
    %v2547 = vunpack.c.h.b16 %v269
    %v2548 = vunpack.c.l.b16 %v270
    %v2549 = vunpack.c.h.b16 %v270
    %v2550 = vunpack.c.l.b16 %v271
    %v2551 = vunpack.c.h.b16 %v271
    %v2552 = vunpack.c.l.b16 %v272
    %v2553 = vunpack.c.h.b16 %v272
    %v2554 = vunpack.c.l.b16 %v273
    %v2555 = vunpack.c.h.b16 %v273
    %v2556 = vunpack.c.l.b16 %v274
    %v2557 = vunpack.c.h.b16 %v274
    %v2558 = vunpack.c.l.b16 %v275
    %v2559 = vunpack.c.h.b16 %v275
    %v2560 = vunpack.c.l.b16 %v276
    %v2561 = vunpack.c.h.b16 %v276
    %v2562 = vunpack.c.l.b16 %v277
    %v2563 = vunpack.c.h.b16 %v277
    %v2564 = vunpack.c.l.b16 %v278
    %v2565 = vunpack.c.h.b16 %v278
    %v2566 = vunpack.c.l.b16 %v279
    %v2567 = vunpack.c.h.b16 %v279
    %v2568 = vunpack.c.l.b16 %v280
    %v2569 = vunpack.c.h.b16 %v280
    %v2570 = vunpack.c.l.b16 %v281
    %v2571 = vunpack.c.h.b16 %v281
    %v2572 = vunpack.c.l.b16 %v282
    %v2573 = vunpack.c.h.b16 %v282
    %v2574 = vunpack.c.l.b16 %v283
    %v2575 = vunpack.c.h.b16 %v283
    %v2576 = vunpack.c.l.b16 %v284
    %v2577 = vunpack.c.h.b16 %v284
    %v2578 = vunpack.c.l.b16 %v285
    %v2579 = vunpack.c.h.b16 %v285
    %v2580 = vunpack.c.l.b16 %v286
    %v2581 = vunpack.c.h.b16 %v286
    %v2582 = vunpack.c.l.b16 %v287
    %v2583 = vunpack.c.h.b16 %v287
    %v2584 = vunpack.c.l.b16 %v288
    %v2585 = vunpack.c.h.b16 %v288
    %v2586 = vunpack.c.l.b16 %v289
    %v2587 = vunpack.c.h.b16 %v289
    %v2588 = vunpack.c.l.b16 %v290
    %v2589 = vunpack.c.h.b16 %v290
    %v2590 = vunpack.c.l.b16 %v291
    %v2591 = vunpack.c.h.b16 %v291
    %v2592 = vunpack.c.l.b16 %v292
    %v2593 = vunpack.c.h.b16 %v292
    %v2594 = vunpack.c.l.b16 %v293
    %v2595 = vunpack.c.h.b16 %v293
    %v2596 = vunpack.c.l.b16 %v294
    %v2597 = vunpack.c.h.b16 %v294
    %v2598 = vunpack.c.l.b16 %v295
    %v2599 = vunpack.c.h.b16 %v295
    %v2600 = vunpack.c.l.b16 %v296
    %v2601 = vunpack.c.h.b16 %v296
    %v2602 = vunpack.c.l.b16 %v297
    %v2603 = vunpack.c.h.b16 %v297
    %v2604 = vunpack.c.l.b16 %v298
    %v2605 = vunpack.c.h.b16 %v298
    %v2606 = vunpack.c.l.b16 %v299
    %v2607 = vunpack.c.h.b16 %v299
    %v2608 = vunpack.c.l.b16 %v300
    %v2609 = vunpack.c.h.b16 %v300
    %v2610 = vunpack.c.l.b16 %v301
    %v2611 = vunpack.c.h.b16 %v301
    %v2612 = vunpack.c.l.b16 %v302
    %v2613 = vunpack.c.h.b16 %v302
    %v2614 = vunpack.c.l.b16 %v303
    %v2615 = vunpack.c.h.b16 %v303
    %v2616 = vunpack.c.l.b16 %v304
    %v2617 = vunpack.c.h.b16 %v304
    %v2618 = vunpack.c.l.b16 %v305
    %v2619 = vunpack.c.h.b16 %v305
    %v2620 = vunpack.c.l.b16 %v306
    %v2621 = vunpack.c.h.b16 %v306
    %v2622 = vunpack.c.l.b16 %v307
    %v2623 = vunpack.c.h.b16 %v307
    %v2624 = vunpack.c.l.b16 %v308
    %v2625 = vunpack.c.h.b16 %v308
    %v2626 = vunpack.c.l.b16 %v309
    %v2627 = vunpack.c.h.b16 %v309
    %v2628 = vunpack.c.l.b16 %v310
    %v2629 = vunpack.c.h.b16 %v310
    %v2630 = vunpack.c.l.b16 %v311
    %v2631 = vunpack.c.h.b16 %v311
    %v2632 = vunpack.c.l.b16 %v312
    %v2633 = vunpack.c.h.b16 %v312
    %v2634 = vunpack.c.l.b16 %v313
    %v2635 = vunpack.c.h.b16 %v313
    %v2636 = vunpack.c.l.b16 %v314
    %v2637 = vunpack.c.h.b16 %v314
    %v2638 = vunpack.c.l.b16 %v315
    %v2639 = vunpack.c.h.b16 %v315
    %v2640 = vunpack.c.l.b16 %v316
    %v2641 = vunpack.c.h.b16 %v316
    %v2642 = vunpack.c.l.b16 %v317
    %v2643 = vunpack.c.h.b16 %v317
    %v2644 = vunpack.c.l.b16 %v318
    %v2645 = vunpack.c.h.b16 %v318
    %v2646 = vunpack.c.l.b16 %v319
    %v2647 = vunpack.c.h.b16 %v319
    %v2648 = vunpack.c.l.b16 %v320
    %v2649 = vunpack.c.h.b16 %v320
    %v2650 = vunpack.c.l.b16 %v321
    %v2651 = vunpack.c.h.b16 %v321
    %v2652 = vunpack.c.l.b16 %v322
    %v2653 = vunpack.c.h.b16 %v322
    %v2654 = vunpack.c.l.b16 %v323
    %v2655 = vunpack.c.h.b16 %v323
    %v2656 = vunpack.c.l.b16 %v324
    %v2657 = vunpack.c.h.b16 %v324
    %v2658 = vunpack.c.l.b16 %v325
    %v2659 = vunpack.c.h.b16 %v325
    %v2660 = vunpack.c.l.b16 %v326
    %v2661 = vunpack.c.h.b16 %v326
    %v2662 = vunpack.c.l.b16 %v327
    %v2663 = vunpack.c.h.b16 %v327
    %v2664 = vunpack.c.l.b16 %v328
    %v2665 = vunpack.c.h.b16 %v328
    %v2666 = vunpack.c.l.b16 %v329
    %v2667 = vunpack.c.h.b16 %v329
    %v2668 = vunpack.c.l.b16 %v330
    %v2669 = vunpack.c.h.b16 %v330
    %v2670 = vunpack.c.l.b16 %v331
    %v2671 = vunpack.c.h.b16 %v331
    %v2672 = vpack.c.b16 %v2420, %v2416
    %v2673 = vpack.c.b16 %v2421, %v2417
    %v2674 = vpack.c.b16 %v2422, %v2418
    %v2675 = vpack.c.b16 %v2423, %v2419
    %v2676 = vpack.c.b16 %v2428, %v2424
    %v2677 = vpack.c.b16 %v2429, %v2425
    %v2678 = vpack.c.b16 %v2430, %v2426
    %v2679 = vpack.c.b16 %v2431, %v2427
    %v2680 = vpack.c.b16 %v2436, %v2432
    %v2681 = vpack.c.b16 %v2437, %v2433
    %v2682 = vpack.c.b16 %v2438, %v2434
    %v2683 = vpack.c.b16 %v2439, %v2435
    %v2684 = vpack.c.b16 %v2444, %v2440
    %v2685 = vpack.c.b16 %v2445, %v2441
    %v2686 = vpack.c.b16 %v2446, %v2442
    %v2687 = vpack.c.b16 %v2447, %v2443
    %v2688 = vpack.c.b16 %v2452, %v2448
    %v2689 = vpack.c.b16 %v2453, %v2449
    %v2690 = vpack.c.b16 %v2454, %v2450
    %v2691 = vpack.c.b16 %v2455, %v2451
    %v2692 = vpack.c.b16 %v2460, %v2456
    %v2693 = vpack.c.b16 %v2461, %v2457
    %v2694 = vpack.c.b16 %v2462, %v2458
    %v2695 = vpack.c.b16 %v2463, %v2459
    %v2696 = vpack.c.b16 %v2468, %v2464
    %v2697 = vpack.c.b16 %v2469, %v2465
    %v2698 = vpack.c.b16 %v2470, %v2466
    %v2699 = vpack.c.b16 %v2471, %v2467
    %v2700 = vpack.c.b16 %v2476, %v2472
    %v2701 = vpack.c.b16 %v2477, %v2473
    %v2702 = vpack.c.b16 %v2478, %v2474
    %v2703 = vpack.c.b16 %v2479, %v2475
    %v2704 = vpack.c.b16 %v2484, %v2480
    %v2705 = vpack.c.b16 %v2485, %v2481
    %v2706 = vpack.c.b16 %v2486, %v2482
    %v2707 = vpack.c.b16 %v2487, %v2483
    %v2708 = vpack.c.b16 %v2492, %v2488
    %v2709 = vpack.c.b16 %v2493, %v2489
    %v2710 = vpack.c.b16 %v2494, %v2490
    %v2711 = vpack.c.b16 %v2495, %v2491
    %v2712 = vpack.c.b16 %v2500, %v2496
    %v2713 = vpack.c.b16 %v2501, %v2497
    %v2714 = vpack.c.b16 %v2502, %v2498
    %v2715 = vpack.c.b16 %v2503, %v2499
    %v2716 = vpack.c.b16 %v2508, %v2504
    %v2717 = vpack.c.b16 %v2509, %v2505
    %v2718 = vpack.c.b16 %v2510, %v2506
    %v2719 = vpack.c.b16 %v2511, %v2507
    %v2720 = vpack.c.b16 %v2516, %v2512
    %v2721 = vpack.c.b16 %v2517, %v2513
    %v2722 = vpack.c.b16 %v2518, %v2514
    %v2723 = vpack.c.b16 %v2519, %v2515
    %v2724 = vpack.c.b16 %v2524, %v2520
    %v2725 = vpack.c.b16 %v2525, %v2521
    %v2726 = vpack.c.b16 %v2526, %v2522
    %v2727 = vpack.c.b16 %v2527, %v2523
    %v2728 = vpack.c.b16 %v2532, %v2528
    %v2729 = vpack.c.b16 %v2533, %v2529
    %v2730 = vpack.c.b16 %v2534, %v2530
    %v2731 = vpack.c.b16 %v2535, %v2531
    %v2732 = vpack.c.b16 %v2540, %v2536
    %v2733 = vpack.c.b16 %v2541, %v2537
    %v2734 = vpack.c.b16 %v2542, %v2538
    %v2735 = vpack.c.b16 %v2543, %v2539
    %v2736 = vpack.c.b16 %v2548, %v2544
    %v2737 = vpack.c.b16 %v2549, %v2545
    %v2738 = vpack.c.b16 %v2550, %v2546
    %v2739 = vpack.c.b16 %v2551, %v2547
    %v2740 = vpack.c.b16 %v2556, %v2552
    %v2741 = vpack.c.b16 %v2557, %v2553
    %v2742 = vpack.c.b16 %v2558, %v2554
    %v2743 = vpack.c.b16 %v2559, %v2555
    %v2744 = vpack.c.b16 %v2564, %v2560
    %v2745 = vpack.c.b16 %v2565, %v2561
    %v2746 = vpack.c.b16 %v2566, %v2562
    %v2747 = vpack.c.b16 %v2567, %v2563
    %v2748 = vpack.c.b16 %v2572, %v2568
    %v2749 = vpack.c.b16 %v2573, %v2569
    %v2750 = vpack.c.b16 %v2574, %v2570
    %v2751 = vpack.c.b16 %v2575, %v2571
    %v2752 = vpack.c.b16 %v2580, %v2576
    %v2753 = vpack.c.b16 %v2581, %v2577
    %v2754 = vpack.c.b16 %v2582, %v2578
    %v2755 = vpack.c.b16 %v2583, %v2579
    %v2756 = vpack.c.b16 %v2588, %v2584
    %v2757 = vpack.c.b16 %v2589, %v2585
    %v2758 = vpack.c.b16 %v2590, %v2586
    %v2759 = vpack.c.b16 %v2591, %v2587
    %v2760 = vpack.c.b16 %v2596, %v2592
    %v2761 = vpack.c.b16 %v2597, %v2593
    %v2762 = vpack.c.b16 %v2598, %v2594
    %v2763 = vpack.c.b16 %v2599, %v2595
    %v2764 = vpack.c.b16 %v2604, %v2600
    %v2765 = vpack.c.b16 %v2605, %v2601
    %v2766 = vpack.c.b16 %v2606, %v2602
    %v2767 = vpack.c.b16 %v2607, %v2603
    %v2768 = vpack.c.b16 %v2612, %v2608
    %v2769 = vpack.c.b16 %v2613, %v2609
    %v2770 = vpack.c.b16 %v2614, %v2610
    %v2771 = vpack.c.b16 %v2615, %v2611
    %v2772 = vpack.c.b16 %v2620, %v2616
    %v2773 = vpack.c.b16 %v2621, %v2617
    %v2774 = vpack.c.b16 %v2622, %v2618
    %v2775 = vpack.c.b16 %v2623, %v2619
    %v2776 = vpack.c.b16 %v2628, %v2624
    %v2777 = vpack.c.b16 %v2629, %v2625
    %v2778 = vpack.c.b16 %v2630, %v2626
    %v2779 = vpack.c.b16 %v2631, %v2627
    %v2780 = vpack.c.b16 %v2636, %v2632
    %v2781 = vpack.c.b16 %v2637, %v2633
    %v2782 = vpack.c.b16 %v2638, %v2634
    %v2783 = vpack.c.b16 %v2639, %v2635
    %v2784 = vpack.c.b16 %v2644, %v2640
    %v2785 = vpack.c.b16 %v2645, %v2641
    %v2786 = vpack.c.b16 %v2646, %v2642
    %v2787 = vpack.c.b16 %v2647, %v2643
    %v2788 = vpack.c.b16 %v2652, %v2648
    %v2789 = vpack.c.b16 %v2653, %v2649
    %v2790 = vpack.c.b16 %v2654, %v2650
    %v2791 = vpack.c.b16 %v2655, %v2651
    %v2792 = vpack.c.b16 %v2660, %v2656
    %v2793 = vpack.c.b16 %v2661, %v2657
    %v2794 = vpack.c.b16 %v2662, %v2658
    %v2795 = vpack.c.b16 %v2663, %v2659
    %v2796 = vpack.c.b16 %v2668, %v2664
    %v2797 = vpack.c.b16 %v2669, %v2665
    %v2798 = vpack.c.b16 %v2670, %v2666
    %v2799 = vpack.c.b16 %v2671, %v2667
    %2928 = vmatprep.subr.bf16.mxu0 %v2673
    %2929 = vmatpush1.bf16.msra.mxu0 %v2672
    %2930 = vmatprep.subr.bf16.mxu0 %v2677
    %2931 = vmatpush1.bf16.msra.mxu0 %v2676
    %2932 = vmatprep.subr.bf16.mxu0 %v2681
    %2933 = vmatpush1.bf16.msra.mxu0 %v2680
    %2934 = vmatprep.subr.bf16.mxu0 %v2685
    %2935 = vmatpush1.bf16.msra.mxu0 %v2684
    %2936 = vmatprep.subr.bf16.mxu0 %v2689
    %2937 = vmatpush1.bf16.msra.mxu0 %v2688
    %2938 = vmatprep.subr.bf16.mxu0 %v2693
    %2939 = vmatpush1.bf16.msra.mxu0 %v2692
    %2940 = vmatprep.subr.bf16.mxu0 %v2697
    %2941 = vmatpush1.bf16.msra.mxu0 %v2696
    %2942 = vmatprep.subr.bf16.mxu0 %v2701
    %2943 = vmatpush1.bf16.msra.mxu0 %v2700
    %2944 = vmatprep.subr.bf16.mxu0 %v2705
    %2945 = vmatpush1.bf16.msra.mxu0 %v2704
    %2946 = vmatprep.subr.bf16.mxu0 %v2709
    %2947 = vmatpush1.bf16.msra.mxu0 %v2708
    %2948 = vmatprep.subr.bf16.mxu0 %v2713
    %2949 = vmatpush1.bf16.msra.mxu0 %v2712
    %2950 = vmatprep.subr.bf16.mxu0 %v2717
    %2951 = vmatpush1.bf16.msra.mxu0 %v2716
    %2952 = vmatprep.subr.bf16.mxu0 %v2721
    %2953 = vmatpush1.bf16.msra.mxu0 %v2720
    %2954 = vmatprep.subr.bf16.mxu0 %v2725
    %2955 = vmatpush1.bf16.msra.mxu0 %v2724
    %2956 = vmatprep.subr.bf16.mxu0 %v2729
    %2957 = vmatpush1.bf16.msra.mxu0 %v2728
    %2958 = vmatprep.subr.bf16.mxu0 %v2733
    %2959 = vmatpush1.bf16.msra.mxu0 %v2732
    %2960 = vmatprep.mubr.bf16.mxu0 %v2285
    %2961 = vmatmul.mubr.bf16.gmra.mrb[0].mxu0 %v2284
    %v2962 = vpop.f32.mrb[0].mxu0
    %v2963 = vadd.f32 0.0, %v2962
    %v2964 = vpop.f32.mrb[0].mxu0
    %v2965 = vadd.f32 0.0, %v2964
    %v2966 = vpop.f32.mrb[0].mxu0
    %v2967 = vpop.f32.mrb[0].mxu0
    %2968 = vdwg.mxu0
    %2969 = vmatprep.subr.bf16.mxu0 %v2737
    %2970 = vmatpush1.bf16.msra.mxu0 %v2736
    %2971 = vmatprep.subr.bf16.mxu0 %v2741
    %2972 = vmatpush1.bf16.msra.mxu0 %v2740
    %2973 = vmatprep.subr.bf16.mxu0 %v2745
    %2974 = vmatpush1.bf16.msra.mxu0 %v2744
    %2975 = vmatprep.subr.bf16.mxu0 %v2749
    %2976 = vmatpush1.bf16.msra.mxu0 %v2748
    %2977 = vmatprep.subr.bf16.mxu0 %v2753
    %2978 = vmatpush1.bf16.msra.mxu0 %v2752
    %2979 = vmatprep.subr.bf16.mxu0 %v2757
    %2980 = vmatpush1.bf16.msra.mxu0 %v2756
    %2981 = vmatprep.subr.bf16.mxu0 %v2761
    %2982 = vmatpush1.bf16.msra.mxu0 %v2760
    %2983 = vmatprep.subr.bf16.mxu0 %v2765
    %2984 = vmatpush1.bf16.msra.mxu0 %v2764
    %2985 = vmatprep.subr.bf16.mxu0 %v2769
    %2986 = vmatpush1.bf16.msra.mxu0 %v2768
    %2987 = vmatprep.subr.bf16.mxu0 %v2773
    %2988 = vmatpush1.bf16.msra.mxu0 %v2772
    %2989 = vmatprep.subr.bf16.mxu0 %v2777
    %2990 = vmatpush1.bf16.msra.mxu0 %v2776
    %2991 = vmatprep.subr.bf16.mxu0 %v2781
    %2992 = vmatpush1.bf16.msra.mxu0 %v2780
    %2993 = vmatprep.subr.bf16.mxu0 %v2785
    %2994 = vmatpush1.bf16.msra.mxu0 %v2784
    %2995 = vmatprep.subr.bf16.mxu0 %v2789
    %2996 = vmatpush1.bf16.msra.mxu0 %v2788
    %2997 = vmatprep.subr.bf16.mxu0 %v2793
    %2998 = vmatpush1.bf16.msra.mxu0 %v2792
    %2999 = vmatprep.subr.bf16.mxu0 %v2797
    %3000 = vmatpush1.bf16.msra.mxu0 %v2796
    %3001 = vmatprep.mubr.bf16.mxu0 %v2287
    %3002 = vmatmul.mubr.bf16.gmra.mrb[0].mxu0 %v2286
    %v3003 = vpop.f32.mrb[0].mxu0
    %v3004 = vadd.f32 %v2963, %v3003
    %v3005 = vpop.f32.mrb[0].mxu0
    %v3006 = vadd.f32 %v2965, %v3005
    %v3007 = vpop.f32.mrb[0].mxu0
    %v3008 = vpop.f32.mrb[0].mxu0
    %3009 = vdwg.mxu0
    %3010 = vmatprep.subr.bf16.mxu0 %v2675
    %3011 = vmatpush1.bf16.msra.mxu0 %v2674
    %3012 = vmatprep.subr.bf16.mxu0 %v2679
    %3013 = vmatpush1.bf16.msra.mxu0 %v2678
    %3014 = vmatprep.subr.bf16.mxu0 %v2683
    %3015 = vmatpush1.bf16.msra.mxu0 %v2682
    %3016 = vmatprep.subr.bf16.mxu0 %v2687
    %3017 = vmatpush1.bf16.msra.mxu0 %v2686
    %3018 = vmatprep.subr.bf16.mxu0 %v2691
    %3019 = vmatpush1.bf16.msra.mxu0 %v2690
    %3020 = vmatprep.subr.bf16.mxu0 %v2695
    %3021 = vmatpush1.bf16.msra.mxu0 %v2694
    %3022 = vmatprep.subr.bf16.mxu0 %v2699
    %3023 = vmatpush1.bf16.msra.mxu0 %v2698
    %3024 = vmatprep.subr.bf16.mxu0 %v2703
    %3025 = vmatpush1.bf16.msra.mxu0 %v2702
    %3026 = vmatprep.subr.bf16.mxu0 %v2707
    %3027 = vmatpush1.bf16.msra.mxu0 %v2706
    %3028 = vmatprep.subr.bf16.mxu0 %v2711
    %3029 = vmatpush1.bf16.msra.mxu0 %v2710
    %3030 = vmatprep.subr.bf16.mxu0 %v2715
    %3031 = vmatpush1.bf16.msra.mxu0 %v2714
    %3032 = vmatprep.subr.bf16.mxu0 %v2719
    %3033 = vmatpush1.bf16.msra.mxu0 %v2718
    %3034 = vmatprep.subr.bf16.mxu0 %v2723
    %3035 = vmatpush1.bf16.msra.mxu0 %v2722
    %3036 = vmatprep.subr.bf16.mxu0 %v2727
    %3037 = vmatpush1.bf16.msra.mxu0 %v2726
    %3038 = vmatprep.subr.bf16.mxu0 %v2731
    %3039 = vmatpush1.bf16.msra.mxu0 %v2730
    %3040 = vmatprep.subr.bf16.mxu0 %v2735
    %3041 = vmatpush1.bf16.msra.mxu0 %v2734
    %3042 = vmatprep.mubr.bf16.mxu0 %v2285
    %3043 = vmatmul.mubr.bf16.gmra.mrb[0].mxu0 %v2284
    %v3044 = vpop.f32.mrb[0].mxu0
    %v3045 = vadd.f32 0.0, %v3044
    %v3046 = vpop.f32.mrb[0].mxu0
    %v3047 = vadd.f32 0.0, %v3046
    %v3048 = vpop.f32.mrb[0].mxu0
    %v3049 = vpop.f32.mrb[0].mxu0
    %3050 = vdwg.mxu0
    %3051 = vmatprep.subr.bf16.mxu0 %v2739
    %3052 = vmatpush1.bf16.msra.mxu0 %v2738
    %3053 = vmatprep.subr.bf16.mxu0 %v2743
    %3054 = vmatpush1.bf16.msra.mxu0 %v2742
    %3055 = vmatprep.subr.bf16.mxu0 %v2747
    %3056 = vmatpush1.bf16.msra.mxu0 %v2746
    %3057 = vmatprep.subr.bf16.mxu0 %v2751
    %3058 = vmatpush1.bf16.msra.mxu0 %v2750
    %3059 = vmatprep.subr.bf16.mxu0 %v2755
    %3060 = vmatpush1.bf16.msra.mxu0 %v2754
    %3061 = vmatprep.subr.bf16.mxu0 %v2759
    %3062 = vmatpush1.bf16.msra.mxu0 %v2758
    %3063 = vmatprep.subr.bf16.mxu0 %v2763
    %3064 = vmatpush1.bf16.msra.mxu0 %v2762
    %3065 = vmatprep.subr.bf16.mxu0 %v2767
    %3066 = vmatpush1.bf16.msra.mxu0 %v2766
    %3067 = vmatprep.subr.bf16.mxu0 %v2771
    %3068 = vmatpush1.bf16.msra.mxu0 %v2770
    %3069 = vmatprep.subr.bf16.mxu0 %v2775
    %3070 = vmatpush1.bf16.msra.mxu0 %v2774
    %3071 = vmatprep.subr.bf16.mxu0 %v2779
    %3072 = vmatpush1.bf16.msra.mxu0 %v2778
    %3073 = vmatprep.subr.bf16.mxu0 %v2783
    %3074 = vmatpush1.bf16.msra.mxu0 %v2782
    %3075 = vmatprep.subr.bf16.mxu0 %v2787
    %3076 = vmatpush1.bf16.msra.mxu0 %v2786
    %3077 = vmatprep.subr.bf16.mxu0 %v2791
    %3078 = vmatpush1.bf16.msra.mxu0 %v2790
    %3079 = vmatprep.subr.bf16.mxu0 %v2795
    %3080 = vmatpush1.bf16.msra.mxu0 %v2794
    %3081 = vmatprep.subr.bf16.mxu0 %v2799
    %3082 = vmatpush1.bf16.msra.mxu0 %v2798
    %3083 = vmatprep.mubr.bf16.mxu0 %v2287
    %3084 = vmatmul.mubr.bf16.gmra.mrb[0].mxu0 %v2286
    %v3085 = vpop.f32.mrb[0].mxu0
    %v3086 = vadd.f32 %v3045, %v3085
    %v3087 = vpop.f32.mrb[0].mxu0
    %v3088 = vadd.f32 %v3047, %v3087
    %v3089 = vpop.f32.mrb[0].mxu0
    %v3090 = vpop.f32.mrb[0].mxu0
    %3091 = vdwg.mxu0
    %v3092 = vpack.c.bf16 %v3004, %v3004
    %v3093 = vpack.c.bf16 %v3006, %v3006
    %v3094 = vpack.c.bf16 %v3086, %v3086
    %v3095 = vpack.c.bf16 %v3088, %v3088
    %3096 = vmatprep.subr.bf16.mxu0 %v1861
    %3097 = vmatpush1.bf16.msra.mxu0 %v1860
    %3098 = vmatprep.subr.bf16.mxu0 %v1865
    %3099 = vmatpush1.bf16.msra.mxu0 %v1864
    %3100 = vmatprep.subr.bf16.mxu0 %v1869
    %3101 = vmatpush1.bf16.msra.mxu0 %v1868
    %3102 = vmatprep.subr.bf16.mxu0 %v1873
    %3103 = vmatpush1.bf16.msra.mxu0 %v1872
    %3104 = vmatprep.subr.bf16.mxu0 %v1877
    %3105 = vmatpush1.bf16.msra.mxu0 %v1876
    %3106 = vmatprep.subr.bf16.mxu0 %v1881
    %3107 = vmatpush1.bf16.msra.mxu0 %v1880
    %3108 = vmatprep.subr.bf16.mxu0 %v1885
    %3109 = vmatpush1.bf16.msra.mxu0 %v1884
    %3110 = vmatprep.subr.bf16.mxu0 %v1889
    %3111 = vmatpush1.bf16.msra.mxu0 %v1888
    %3112 = vmatprep.subr.bf16.mxu0 %v1893
    %3113 = vmatpush1.bf16.msra.mxu0 %v1892
    %3114 = vmatprep.subr.bf16.mxu0 %v1897
    %3115 = vmatpush1.bf16.msra.mxu0 %v1896
    %3116 = vmatprep.subr.bf16.mxu0 %v1901
    %3117 = vmatpush1.bf16.msra.mxu0 %v1900
    %3118 = vmatprep.subr.bf16.mxu0 %v1905
    %3119 = vmatpush1.bf16.msra.mxu0 %v1904
    %3120 = vmatprep.subr.bf16.mxu0 %v1909
    %3121 = vmatpush1.bf16.msra.mxu0 %v1908
    %3122 = vmatprep.subr.bf16.mxu0 %v1913
    %3123 = vmatpush1.bf16.msra.mxu0 %v1912
    %3124 = vmatprep.subr.bf16.mxu0 %v1917
    %3125 = vmatpush1.bf16.msra.mxu0 %v1916
    %3126 = vmatprep.subr.bf16.mxu0 %v1921
    %3127 = vmatpush1.bf16.msra.mxu0 %v1920
    %3128 = vmatprep.mubr.bf16.mxu0 %v3093
    %3129 = vmatmul.mubr.bf16.gmra.mrb[0].mxu0 %v3092
    %v3130 = vpop.f32.mrb[0].mxu0
    %v3131 = vadd.f32 %v465, %v3130
    %v3132 = vpop.f32.mrb[0].mxu0
    %v3133 = vadd.f32 %v469, %v3132
    %v3134 = vpop.f32.mrb[0].mxu0
    %v3135 = vpop.f32.mrb[0].mxu0
    %3136 = vdwg.mxu0
    %3137 = vmatprep.subr.bf16.mxu0 %v1925
    %3138 = vmatpush1.bf16.msra.mxu0 %v1924
    %3139 = vmatprep.subr.bf16.mxu0 %v1929
    %3140 = vmatpush1.bf16.msra.mxu0 %v1928
    %3141 = vmatprep.subr.bf16.mxu0 %v1933
    %3142 = vmatpush1.bf16.msra.mxu0 %v1932
    %3143 = vmatprep.subr.bf16.mxu0 %v1937
    %3144 = vmatpush1.bf16.msra.mxu0 %v1936
    %3145 = vmatprep.subr.bf16.mxu0 %v1941
    %3146 = vmatpush1.bf16.msra.mxu0 %v1940
    %3147 = vmatprep.subr.bf16.mxu0 %v1945
    %3148 = vmatpush1.bf16.msra.mxu0 %v1944
    %3149 = vmatprep.subr.bf16.mxu0 %v1949
    %3150 = vmatpush1.bf16.msra.mxu0 %v1948
    %3151 = vmatprep.subr.bf16.mxu0 %v1953
    %3152 = vmatpush1.bf16.msra.mxu0 %v1952
    %3153 = vmatprep.subr.bf16.mxu0 %v1957
    %3154 = vmatpush1.bf16.msra.mxu0 %v1956
    %3155 = vmatprep.subr.bf16.mxu0 %v1961
    %3156 = vmatpush1.bf16.msra.mxu0 %v1960
    %3157 = vmatprep.subr.bf16.mxu0 %v1965
    %3158 = vmatpush1.bf16.msra.mxu0 %v1964
    %3159 = vmatprep.subr.bf16.mxu0 %v1969
    %3160 = vmatpush1.bf16.msra.mxu0 %v1968
    %3161 = vmatprep.subr.bf16.mxu0 %v1973
    %3162 = vmatpush1.bf16.msra.mxu0 %v1972
    %3163 = vmatprep.subr.bf16.mxu0 %v1977
    %3164 = vmatpush1.bf16.msra.mxu0 %v1976
    %3165 = vmatprep.subr.bf16.mxu0 %v1981
    %3166 = vmatpush1.bf16.msra.mxu0 %v1980
    %3167 = vmatprep.subr.bf16.mxu0 %v1985
    %3168 = vmatpush1.bf16.msra.mxu0 %v1984
    %3169 = vmatprep.mubr.bf16.mxu0 %v3095
    %3170 = vmatmul.mubr.bf16.gmra.mrb[0].mxu0 %v3094
    %v3171 = vpop.f32.mrb[0].mxu0
    %v3172 = vadd.f32 %v3131, %v3171
    %v3173 = vpop.f32.mrb[0].mxu0
    %v3174 = vadd.f32 %v3133, %v3173
    %v3175 = vpop.f32.mrb[0].mxu0
    %v3176 = vpop.f32.mrb[0].mxu0
    %3177 = vdwg.mxu0
    %3178 = vmatprep.subr.bf16.mxu0 %v1863
    %3179 = vmatpush1.bf16.msra.mxu0 %v1862
    %3180 = vmatprep.subr.bf16.mxu0 %v1867
    %3181 = vmatpush1.bf16.msra.mxu0 %v1866
    %3182 = vmatprep.subr.bf16.mxu0 %v1871
    %3183 = vmatpush1.bf16.msra.mxu0 %v1870
    %3184 = vmatprep.subr.bf16.mxu0 %v1875
    %3185 = vmatpush1.bf16.msra.mxu0 %v1874
    %3186 = vmatprep.subr.bf16.mxu0 %v1879
    %3187 = vmatpush1.bf16.msra.mxu0 %v1878
    %3188 = vmatprep.subr.bf16.mxu0 %v1883
    %3189 = vmatpush1.bf16.msra.mxu0 %v1882
    %3190 = vmatprep.subr.bf16.mxu0 %v1887
    %3191 = vmatpush1.bf16.msra.mxu0 %v1886
    %3192 = vmatprep.subr.bf16.mxu0 %v1891
    %3193 = vmatpush1.bf16.msra.mxu0 %v1890
    %3194 = vmatprep.subr.bf16.mxu0 %v1895
    %3195 = vmatpush1.bf16.msra.mxu0 %v1894
    %3196 = vmatprep.subr.bf16.mxu0 %v1899
    %3197 = vmatpush1.bf16.msra.mxu0 %v1898
    %3198 = vmatprep.subr.bf16.mxu0 %v1903
    %3199 = vmatpush1.bf16.msra.mxu0 %v1902
    %3200 = vmatprep.subr.bf16.mxu0 %v1907
    %3201 = vmatpush1.bf16.msra.mxu0 %v1906
    %3202 = vmatprep.subr.bf16.mxu0 %v1911
    %3203 = vmatpush1.bf16.msra.mxu0 %v1910
    %3204 = vmatprep.subr.bf16.mxu0 %v1915
    %3205 = vmatpush1.bf16.msra.mxu0 %v1914
    %3206 = vmatprep.subr.bf16.mxu0 %v1919
    %3207 = vmatpush1.bf16.msra.mxu0 %v1918
    %3208 = vmatprep.subr.bf16.mxu0 %v1923
    %3209 = vmatpush1.bf16.msra.mxu0 %v1922
    %3210 = vmatprep.mubr.bf16.mxu0 %v3093
    %3211 = vmatmul.mubr.bf16.gmra.mrb[0].mxu0 %v3092
    %v3212 = vpop.f32.mrb[0].mxu0
    %v3213 = vadd.f32 %v473, %v3212
    %v3214 = vpop.f32.mrb[0].mxu0
    %v3215 = vadd.f32 %v477, %v3214
    %v3216 = vpop.f32.mrb[0].mxu0
    %v3217 = vpop.f32.mrb[0].mxu0
    %3218 = vdwg.mxu0
    %3219 = vmatprep.subr.bf16.mxu0 %v1927
    %3220 = vmatpush1.bf16.msra.mxu0 %v1926
    %3221 = vmatprep.subr.bf16.mxu0 %v1931
    %3222 = vmatpush1.bf16.msra.mxu0 %v1930
    %3223 = vmatprep.subr.bf16.mxu0 %v1935
    %3224 = vmatpush1.bf16.msra.mxu0 %v1934
    %3225 = vmatprep.subr.bf16.mxu0 %v1939
    %3226 = vmatpush1.bf16.msra.mxu0 %v1938
    %3227 = vmatprep.subr.bf16.mxu0 %v1943
    %3228 = vmatpush1.bf16.msra.mxu0 %v1942
    %3229 = vmatprep.subr.bf16.mxu0 %v1947
    %3230 = vmatpush1.bf16.msra.mxu0 %v1946
    %3231 = vmatprep.subr.bf16.mxu0 %v1951
    %3232 = vmatpush1.bf16.msra.mxu0 %v1950
    %3233 = vmatprep.subr.bf16.mxu0 %v1955
    %3234 = vmatpush1.bf16.msra.mxu0 %v1954
    %3235 = vmatprep.subr.bf16.mxu0 %v1959
    %3236 = vmatpush1.bf16.msra.mxu0 %v1958
    %3237 = vmatprep.subr.bf16.mxu0 %v1963
    %3238 = vmatpush1.bf16.msra.mxu0 %v1962
    %3239 = vmatprep.subr.bf16.mxu0 %v1967
    %3240 = vmatpush1.bf16.msra.mxu0 %v1966
    %3241 = vmatprep.subr.bf16.mxu0 %v1971
    %3242 = vmatpush1.bf16.msra.mxu0 %v1970
    %3243 = vmatprep.subr.bf16.mxu0 %v1975
    %3244 = vmatpush1.bf16.msra.mxu0 %v1974
    %3245 = vmatprep.subr.bf16.mxu0 %v1979
    %3246 = vmatpush1.bf16.msra.mxu0 %v1978
    %3247 = vmatprep.subr.bf16.mxu0 %v1983
    %3248 = vmatpush1.bf16.msra.mxu0 %v1982
    %3249 = vmatprep.subr.bf16.mxu0 %v1987
    %3250 = vmatpush1.bf16.msra.mxu0 %v1986
    %3251 = vmatprep.mubr.bf16.mxu0 %v3095
    %3252 = vmatmul.mubr.bf16.gmra.mrb[0].mxu0 %v3094
    %v3253 = vpop.f32.mrb[0].mxu0
    %v3254 = vadd.f32 %v3213, %v3253
    %v3255 = vpop.f32.mrb[0].mxu0
    %v3256 = vadd.f32 %v3215, %v3255
    %v3257 = vpop.f32.mrb[0].mxu0
    %v3258 = vpop.f32.mrb[0].mxu0
    %3259 = vdwg.mxu0
    %v3260 = vmax.f32 %v3172, 0.0
    %v3261 = vmax.f32 %v3174, 0.0
    %v3262 = vmax.f32 %v3254, 0.0
    %v3263 = vmax.f32 %v3256, 0.0
    %3264 = vst [vmem:[#allocation10] sm:$0xff] %v3260
    %3265 = vst [vmem:[#allocation10 + $0x8] sm:$0xff] %v3261
    %3266 = vst [vmem:[#allocation10 + $0x10] sm:$0xff] %v3262
    %3267 = vst [vmem:[#allocation10 + $0x18] sm:$0xff] %v3263
    // Predicated region
    $region38: #{tpu_custom_call.1} parent=1 // pred_check
      _
    $region39: #{tpu_custom_call.1} parent=1 // pred_check_branch
      %3269 = sbr.rel (0) target = $region41
    $region40: #{tpu_custom_call.1} parent=1 // pred_region
      %s3271 = ssub.s32 512, 512
      %3272 = vsyncadd [#allocation4], %s3271
      %s3274 = sshll.u32 [#allocation10], 4
      %s3275 = int_to_ptr.vmem [resolvable:$true] %s3274
      %3277 = dma.vmem_to_hbm [thread:$0]  %s3275, 512, %s5, [#allocation4]
    $region41: #{tpu_custom_call.1} parent=1 // pred_fallthru
      _
    // Predicated region
    $region42: #{tpu_custom_call.1} parent=1 // pred_check
      _
    $region43: #{tpu_custom_call.1} parent=1 // pred_check_branch
      %3279 = sbr.rel (0) target = $region45
    $region44: #{tpu_custom_call.1} parent=1 // pred_region
      %3280 = dma.done [#allocation4], 512
    $region45: #{tpu_custom_call.1} parent=1 // pred_fallthru
      _
    %3281 = vsyncpa [#allocation3], 1
    %3282 = vsyncpa [#allocation6], 1
    %3283 = vsyncpa [#allocation9], 1
    %3284 = vsyncpa [#allocation4], 1

</llo_original>
